<compile_context>
chip_gen: v6e
topology: v6e:2x2x1
jax: 0.10.0
libtpu: 0.0.40
codegen_flags: <defaults>
</compile_context>

<pallas_src>
import jax
import jax.numpy as jnp
from jax import lax
from jax.experimental import pallas as pl
from jax.experimental.pallas import tpu as pltpu

KH = 5  # conv kernel height/width


# ----------------------------------------------------------------------------
# Parameter -> kernel-operand preprocessing (runs once, outside the kernel)
# ----------------------------------------------------------------------------
def _make_band_matrices(w_oihw, out_w, dtype=jnp.bfloat16):
    """Banded matrices B_i (one per kernel row i) of shape (in_w*C, out_w*O)
    such that, with X in (H, W*C) layout (lane = w*C + c) and Y in (OH, OW*O)
    layout (lane = q*O + o):   Y[p, :] = sum_i X[p + i, :] @ B_i ."""
    O, C, kh, kw = w_oihw.shape
    in_w = out_w + kw - 1
    wt = jnp.transpose(w_oihw, (2, 3, 1, 0))            # (kh, kw, C, O)
    w_idx = jnp.arange(in_w)[:, None]                   # (in_w, 1)
    q_idx = jnp.arange(out_w)[None, :]                  # (1, out_w)
    j = w_idx - q_idx                                   # kernel col = w - q
    valid = (j >= 0) & (j < kw)
    jc = jnp.clip(j, 0, kw - 1)
    band = wt[:, jc, :, :]                              # (kh, in_w, out_w, C, O)
    band = band * valid[None, :, :, None, None].astype(wt.dtype)
    band = jnp.transpose(band, (0, 1, 3, 2, 4))         # (kh, in_w, C, out_w, O)
    band = band.reshape(kh, in_w * C, out_w * O)
    return band.astype(dtype)


def _height_pool_matrix(oh, dtype=jnp.bfloat16):
    rows = jnp.arange(oh // 2)[:, None]
    cols = jnp.arange(oh)[None, :]
    m = (cols == 2 * rows) | (cols == 2 * rows + 1)
    return (0.5 * m.astype(jnp.float32)).astype(dtype)  # (oh//2, oh)


def _width_pool_matrix(ow, C, dtype=jnp.bfloat16):
    lin = jnp.arange(ow * C)
    lout = jnp.arange((ow // 2) * C)
    m = (((lin[:, None] // C) // 2) == (lout[None, :] // C)) & \
        ((lin[:, None] % C) == (lout[None, :] % C))
    return (0.5 * m.astype(jnp.float32)).astype(dtype)  # (ow*C, (ow//2)*C)


def _bias_row(b, out_w):
    # lane index = q*O + o  ->  tiled bias row of shape (1, out_w*O)
    return jnp.tile(b, out_w).astype(jnp.float32)[None, :]


def prepare_operands(params):
    """Turn PyTorch-layout parameters into the MXU-friendly operand set."""
    return dict(
        band1=_make_band_matrices(params["c1_w"], 28),   # (5, 32, 168)
        bias1=_bias_row(params["c1_b"], 28),             # (1, 168)
        hpool1=_height_pool_matrix(28),                  # (14, 28)
        wpool1=_width_pool_matrix(28, 6),                # (168, 84)
        band2=_make_band_matrices(params["c2_w"], 10),   # (5, 84, 160)
        bias2=_bias_row(params["c2_b"], 10),             # (1, 160)
        hpool2=_height_pool_matrix(10),                  # (5, 10)
        wpool2=_width_pool_matrix(10, 16),               # (160, 80)
        band3=_make_band_matrices(params["c3_w"], 1),    # (5, 80, 120)
        bias3=_bias_row(params["c3_b"], 1),              # (1, 120)
        fc1_w=params["fc1_w"].astype(jnp.bfloat16),      # (120, 84)
        fc1_b=params["fc1_b"].astype(jnp.float32)[None, :],   # (1, 84)
        fc2_w=params["fc2_w"].astype(jnp.bfloat16),      # (84, 10)
        fc2_b=params["fc2_b"].astype(jnp.float32)[None, :],   # (1, 10)
    )


# ----------------------------------------------------------------------------
# The fused Pallas kernel (one grid step = one batch element)
# ----------------------------------------------------------------------------
def _lenet_kernel(x_ref, band1_ref, bias1_ref, hp1_ref, wp1_ref,
                  band2_ref, bias2_ref, hp2_ref, wp2_ref,
                  band3_ref, bias3_ref, fc1w_ref, fc1b_ref, fc2w_ref, fc2b_ref,
                  out_ref):
    f32, bf16 = jnp.float32, jnp.bfloat16

    def mm(a, b):  # bf16 MXU operands, f32 accumulation
        return jnp.dot(a.astype(bf16), b.astype(bf16),
                       preferred_element_type=f32)

    def conv_relu(x, band_ref, bias_ref, oh):
        acc = bias_ref[...]                              # (1, OW*O) f32
        for i in range(KH):
            acc = acc + mm(x[i:i + oh, :], band_ref[i])  # row-shifted matmuls
        return jnp.maximum(acc, 0.0)                     # (oh, OW*O) f32

    def pool(y, hp_ref, wp_ref):
        z = mm(hp_ref[...], y)                           # height pool
        return mm(z, wp_ref[...])                        # width pool

    x = x_ref[0].astype(f32)                             # (32, 32)  [H, W*C]
    y1 = conv_relu(x, band1_ref, bias1_ref, 28)          # (28, 168)
    x2 = pool(y1, hp1_ref, wp1_ref)                      # (14, 84)
    y2 = conv_relu(x2, band2_ref, bias2_ref, 10)         # (10, 160)
    x3 = pool(y2, hp2_ref, wp2_ref)                      # (5, 80)
    y3 = conv_relu(x3, band3_ref, bias3_ref, 1)          # (1, 120)
    h = jnp.maximum(mm(y3, fc1w_ref[...]) + fc1b_ref[...], 0.0)   # (1, 84)
    logits = mm(h, fc2w_ref[...]) + fc2b_ref[...]                 # (1, 10)
    out_ref[0] = logits


# ----------------------------------------------------------------------------
# Wrapper
# ----------------------------------------------------------------------------
def lenet_forward(ops, x_nchw):
    N, C, H, W = x_nchw.shape
    # NCHW -> (N, H, W*C) with lane index = w*C + c (for C==1 a pure reshape).
    x = jnp.transpose(x_nchw, (0, 2, 3, 1)).reshape(N, H, W * C)
    x = x.astype(jnp.float32)

    operands = (x, ops["band1"], ops["bias1"], ops["hpool1"], ops["wpool1"],
                ops["band2"], ops["bias2"], ops["hpool2"], ops["wpool2"],
                ops["band3"], ops["bias3"], ops["fc1_w"], ops["fc1_b"],
                ops["fc2_w"], ops["fc2_b"])

    def full_spec(a):
        nd = a.ndim
        return pl.BlockSpec(a.shape, lambda i, _nd=nd: (0,) * _nd)

    in_specs = [pl.BlockSpec((1, H, W * C), lambda i: (i, 0, 0))]
    in_specs += [full_spec(a) for a in operands[1:]]

    num_classes = ops["fc2_b"].shape[1]
    out = pl.pallas_call(
        _lenet_kernel,
        out_shape=jax.ShapeDtypeStruct((N, 1, num_classes), jnp.float32),
        grid=(N,),
        in_specs=in_specs,
        out_specs=pl.BlockSpec((1, 1, num_classes), lambda i: (i, 0, 0)),
        compiler_params=pltpu.CompilerParams(
            dimension_semantics=("parallel",)),
    )(*operands)
    return out.reshape(N, num_classes)


# ----------------------------------------------------------------------------
# Deterministic synthetic parameters (shapes follow nn.Module.__init__)
# ----------------------------------------------------------------------------
def init_params(key, in_channels=1, num_classes=10):
    ks = jax.random.split(key, 10)

    def conv_p(kw_key, kb_key, o, i):
        fan_in = i * 5 * 5
        w = jax.random.normal(kw_key, (o, i, 5, 5), jnp.float32) / jnp.sqrt(fan_in)
        b = 0.01 * jax.random.normal(kb_key, (o,), jnp.float32)
        return w, b

    def fc_p(kw_key, kb_key, i, o):
        w = jax.random.normal(kw_key, (i, o), jnp.float32) / jnp.sqrt(i)
        b = 0.01 * jax.random.normal(kb_key, (o,), jnp.float32)
        return w, b

    c1_w, c1_b = conv_p(ks[0], ks[1], 6, in_channels)
    c2_w, c2_b = conv_p(ks[2], ks[3], 16, 6)
    c3_w, c3_b = conv_p(ks[4], ks[5], 120, 16)
    fc1_w, fc1_b = fc_p(ks[6], ks[7], 120, 84)
    fc2_w, fc2_b = fc_p(ks[8], ks[9], 84, num_classes)
    return dict(c1_w=c1_w, c1_b=c1_b, c2_w=c2_w, c2_b=c2_b,
                c3_w=c3_w, c3_b=c3_b, fc1_w=fc1_w, fc1_b=fc1_b,
                fc2_w=fc2_w, fc2_b=fc2_b)


# Pure-JAX f32 reference (mirrors Le_net.forward) for a loose sanity check.
def lenet_reference(params, x_nchw):
    x = x_nchw.astype(jnp.float32)

    def conv_relu(x, w, b):
        y = lax.conv_general_dilated(
            x, w.astype(jnp.float32), window_strides=(1, 1), padding="VALID",
            dimension_numbers=("NCHW", "OIHW", "NCHW"),
            precision=lax.Precision.HIGHEST)
        return jnp.maximum(y + b[None, :, None, None], 0.0)

    def avgpool(x):
        N, C, H, W = x.shape
        return x.reshape(N, C, H // 2, 2, W // 2, 2).mean(axis=(3, 5))

    x = avgpool(conv_relu(x, params["c1_w"], params["c1_b"]))
    x = avgpool(conv_relu(x, params["c2_w"], params["c2_b"]))
    x = conv_relu(x, params["c3_w"], params["c3_b"])
    x = x.reshape(x.shape[0], -1)
    x = jnp.maximum(
        jnp.dot(x, params["fc1_w"], precision=lax.Precision.HIGHEST)
        + params["fc1_b"], 0.0)
    return (jnp.dot(x, params["fc2_w"], precision=lax.Precision.HIGHEST)
            + params["fc2_b"])


if __name__ == "__main__":
    key = jax.random.PRNGKey(0)
    k_x, k_p = jax.random.split(key)
    # 32x32 input is required for the [6,'M',16,'M',120] stack to reduce to 1x1.
    x = jax.random.normal(k_x, (2, 1, 32, 32), jnp.float32)
    params = init_params(k_p, in_channels=1, num_classes=10)

    ops = prepare_operands(params)            # one-time weight preprocessing
    fwd = jax.jit(lenet_forward)
    out = jax.block_until_ready(fwd(ops, x))
    assert out.shape == (2, 10), out.shape

    # Loose sanity check vs an f32 reference (kernel uses bf16 MXU operands).
    ref = jax.block_until_ready(lenet_reference(params, x))
    err = float(jnp.max(jnp.abs(out - ref)))
    assert err < 0.1, f"max abs error vs reference: {err}"
    print("KERNEL_OK")
</pallas_src>

<mosaic_0001>
module attributes {stable_mosaic.version = 11 : i64} {
  func.func @_lenet_kernel(%arg0: i32, %arg1: memref<1x32x32xf32, #tpu.memory_space<vmem>>, %arg2: memref<5x32x168xbf16, #tpu.memory_space<vmem>>, %arg3: memref<1x168xf32, #tpu.memory_space<vmem>>, %arg4: memref<14x28xbf16, #tpu.memory_space<vmem>>, %arg5: memref<168x84xbf16, #tpu.memory_space<vmem>>, %arg6: memref<5x84x160xbf16, #tpu.memory_space<vmem>>, %arg7: memref<1x160xf32, #tpu.memory_space<vmem>>, %arg8: memref<5x10xbf16, #tpu.memory_space<vmem>>, %arg9: memref<160x80xbf16, #tpu.memory_space<vmem>>, %arg10: memref<5x80x120xbf16, #tpu.memory_space<vmem>>, %arg11: memref<1x120xf32, #tpu.memory_space<vmem>>, %arg12: memref<120x84xbf16, #tpu.memory_space<vmem>>, %arg13: memref<1x84xf32, #tpu.memory_space<vmem>>, %arg14: memref<84x10xbf16, #tpu.memory_space<vmem>>, %arg15: memref<1x10xf32, #tpu.memory_space<vmem>>, %arg16: memref<1x1x10xf32, #tpu.memory_space<vmem>>) attributes {dimension_semantics = [#tpu.dimension_semantics<parallel>], iteration_bounds = array<i64: 2>, scalar_prefetch = 0 : i64, scratch_operands = 0 : i64, tpu.core_type = #tpu.core_type<tc>, window_params = [{transform_indices = @transform_0, window_bounds = array<i64: 1, 32, 32>}, {pipeline_mode = #tpu.pipeline_mode<synchronous>, transform_indices = @transform_1, window_bounds = array<i64: 5, 32, 168>}, {pipeline_mode = #tpu.pipeline_mode<synchronous>, transform_indices = @transform_2, window_bounds = array<i64: 1, 168>}, {pipeline_mode = #tpu.pipeline_mode<synchronous>, transform_indices = @transform_3, window_bounds = array<i64: 14, 28>}, {pipeline_mode = #tpu.pipeline_mode<synchronous>, transform_indices = @transform_4, window_bounds = array<i64: 168, 84>}, {pipeline_mode = #tpu.pipeline_mode<synchronous>, transform_indices = @transform_5, window_bounds = array<i64: 5, 84, 160>}, {pipeline_mode = #tpu.pipeline_mode<synchronous>, transform_indices = @transform_6, window_bounds = array<i64: 1, 160>}, {pipeline_mode = #tpu.pipeline_mode<synchronous>, transform_indices = @transform_7, window_bounds = array<i64: 5, 10>}, {pipeline_mode = #tpu.pipeline_mode<synchronous>, transform_indices = @transform_8, window_bounds = array<i64: 160, 80>}, {pipeline_mode = #tpu.pipeline_mode<synchronous>, transform_indices = @transform_9, window_bounds = array<i64: 5, 80, 120>}, {pipeline_mode = #tpu.pipeline_mode<synchronous>, transform_indices = @transform_10, window_bounds = array<i64: 1, 120>}, {pipeline_mode = #tpu.pipeline_mode<synchronous>, transform_indices = @transform_11, window_bounds = array<i64: 120, 84>}, {pipeline_mode = #tpu.pipeline_mode<synchronous>, transform_indices = @transform_12, window_bounds = array<i64: 1, 84>}, {pipeline_mode = #tpu.pipeline_mode<synchronous>, transform_indices = @transform_13, window_bounds = array<i64: 84, 10>}, {pipeline_mode = #tpu.pipeline_mode<synchronous>, transform_indices = @transform_14, window_bounds = array<i64: 1, 10>}, {transform_indices = @transform_15, window_bounds = array<i64: 1, 1, 10>}]} {
    %c0 = arith.constant 0 : index
    %c0_0 = arith.constant 0 : index
    %c0_1 = arith.constant 0 : index
    %0 = vector.load %arg1[%c0, %c0_0, %c0_1] : memref<1x32x32xf32, #tpu.memory_space<vmem>>, vector<1x32x32xf32>
    %1 = vector.shape_cast %0 : vector<1x32x32xf32> to vector<32x32xf32>
    %c0_2 = arith.constant 0 : index
    %c0_3 = arith.constant 0 : index
    %2 = vector.load %arg3[%c0_2, %c0_3] : memref<1x168xf32, #tpu.memory_space<vmem>>, vector<1x168xf32>
    %3 = vector.extract_strided_slice %1 {offsets = [0, 0], sizes = [28, 32], strides = [1, 1]} : vector<32x32xf32> to vector<28x32xf32>
    %c0_4 = arith.constant 0 : index
    %c0_5 = arith.constant 0 : index
    %c0_6 = arith.constant 0 : index
    %4 = vector.load %arg2[%c0_4, %c0_5, %c0_6] : memref<5x32x168xbf16, #tpu.memory_space<vmem>>, vector<1x32x168xbf16>
    %5 = vector.shape_cast %4 : vector<1x32x168xbf16> to vector<32x168xbf16>
    %6 = arith.truncf %3 : vector<28x32xf32> to vector<28x32xbf16>
    %cst = arith.constant dense<0.000000e+00> : vector<28x168xf32>
    %7 = tpu.matmul %6, %5, %cst {dimension_numbers = #tpu.dot_dimension_numbers<[1], [0], [0], [1], [0, 0, 1, 1], [], []>} : vector<28x32xbf16>, vector<32x168xbf16>, vector<28x168xf32> -> vector<28x168xf32>
    %8 = vector.broadcast %2 : vector<1x168xf32> to vector<28x168xf32>
    %9 = arith.addf %8, %7 : vector<28x168xf32>
    %10 = vector.extract_strided_slice %1 {offsets = [1, 0], sizes = [28, 32], strides = [1, 1]} : vector<32x32xf32> to vector<28x32xf32>
    %c1 = arith.constant 1 : index
    %c0_7 = arith.constant 0 : index
    %c0_8 = arith.constant 0 : index
    %11 = vector.load %arg2[%c1, %c0_7, %c0_8] : memref<5x32x168xbf16, #tpu.memory_space<vmem>>, vector<1x32x168xbf16>
    %12 = vector.shape_cast %11 : vector<1x32x168xbf16> to vector<32x168xbf16>
    %13 = arith.truncf %10 : vector<28x32xf32> to vector<28x32xbf16>
    %cst_9 = arith.constant dense<0.000000e+00> : vector<28x168xf32>
    %14 = tpu.matmul %13, %12, %cst_9 {dimension_numbers = #tpu.dot_dimension_numbers<[1], [0], [0], [1], [0, 0, 1, 1], [], []>} : vector<28x32xbf16>, vector<32x168xbf16>, vector<28x168xf32> -> vector<28x168xf32>
    %15 = arith.addf %9, %14 : vector<28x168xf32>
    %16 = vector.extract_strided_slice %1 {offsets = [2, 0], sizes = [28, 32], strides = [1, 1]} : vector<32x32xf32> to vector<28x32xf32>
    %c2 = arith.constant 2 : index
    %c0_10 = arith.constant 0 : index
    %c0_11 = arith.constant 0 : index
    %17 = vector.load %arg2[%c2, %c0_10, %c0_11] : memref<5x32x168xbf16, #tpu.memory_space<vmem>>, vector<1x32x168xbf16>
    %18 = vector.shape_cast %17 : vector<1x32x168xbf16> to vector<32x168xbf16>
    %19 = arith.truncf %16 : vector<28x32xf32> to vector<28x32xbf16>
    %cst_12 = arith.constant dense<0.000000e+00> : vector<28x168xf32>
    %20 = tpu.matmul %19, %18, %cst_12 {dimension_numbers = #tpu.dot_dimension_numbers<[1], [0], [0], [1], [0, 0, 1, 1], [], []>} : vector<28x32xbf16>, vector<32x168xbf16>, vector<28x168xf32> -> vector<28x168xf32>
    %21 = arith.addf %15, %20 : vector<28x168xf32>
    %22 = vector.extract_strided_slice %1 {offsets = [3, 0], sizes = [28, 32], strides = [1, 1]} : vector<32x32xf32> to vector<28x32xf32>
    %c3 = arith.constant 3 : index
    %c0_13 = arith.constant 0 : index
    %c0_14 = arith.constant 0 : index
    %23 = vector.load %arg2[%c3, %c0_13, %c0_14] : memref<5x32x168xbf16, #tpu.memory_space<vmem>>, vector<1x32x168xbf16>
    %24 = vector.shape_cast %23 : vector<1x32x168xbf16> to vector<32x168xbf16>
    %25 = arith.truncf %22 : vector<28x32xf32> to vector<28x32xbf16>
    %cst_15 = arith.constant dense<0.000000e+00> : vector<28x168xf32>
    %26 = tpu.matmul %25, %24, %cst_15 {dimension_numbers = #tpu.dot_dimension_numbers<[1], [0], [0], [1], [0, 0, 1, 1], [], []>} : vector<28x32xbf16>, vector<32x168xbf16>, vector<28x168xf32> -> vector<28x168xf32>
    %27 = arith.addf %21, %26 : vector<28x168xf32>
    %28 = vector.extract_strided_slice %1 {offsets = [4, 0], sizes = [28, 32], strides = [1, 1]} : vector<32x32xf32> to vector<28x32xf32>
    %c4 = arith.constant 4 : index
    %c0_16 = arith.constant 0 : index
    %c0_17 = arith.constant 0 : index
    %29 = vector.load %arg2[%c4, %c0_16, %c0_17] : memref<5x32x168xbf16, #tpu.memory_space<vmem>>, vector<1x32x168xbf16>
    %30 = vector.shape_cast %29 : vector<1x32x168xbf16> to vector<32x168xbf16>
    %31 = arith.truncf %28 : vector<28x32xf32> to vector<28x32xbf16>
    %cst_18 = arith.constant dense<0.000000e+00> : vector<28x168xf32>
    %32 = tpu.matmul %31, %30, %cst_18 {dimension_numbers = #tpu.dot_dimension_numbers<[1], [0], [0], [1], [0, 0, 1, 1], [], []>} : vector<28x32xbf16>, vector<32x168xbf16>, vector<28x168xf32> -> vector<28x168xf32>
    %33 = arith.addf %27, %32 : vector<28x168xf32>
    %cst_19 = arith.constant 0.000000e+00 : f32
    %34 = vector.broadcast %cst_19 : f32 to vector<28x168xf32>
    %35 = arith.maximumf %33, %34 : vector<28x168xf32>
    %c0_20 = arith.constant 0 : index
    %c0_21 = arith.constant 0 : index
    %36 = vector.load %arg4[%c0_20, %c0_21] : memref<14x28xbf16, #tpu.memory_space<vmem>>, vector<14x28xbf16>
    %37 = arith.truncf %35 : vector<28x168xf32> to vector<28x168xbf16>
    %cst_22 = arith.constant dense<0.000000e+00> : vector<14x168xf32>
    %38 = tpu.matmul %36, %37, %cst_22 {dimension_numbers = #tpu.dot_dimension_numbers<[1], [0], [0], [1], [0, 0, 1, 1], [], []>} : vector<14x28xbf16>, vector<28x168xbf16>, vector<14x168xf32> -> vector<14x168xf32>
    %c0_23 = arith.constant 0 : index
    %c0_24 = arith.constant 0 : index
    %39 = vector.load %arg5[%c0_23, %c0_24] : memref<168x84xbf16, #tpu.memory_space<vmem>>, vector<168x84xbf16>
    %40 = arith.truncf %38 : vector<14x168xf32> to vector<14x168xbf16>
    %cst_25 = arith.constant dense<0.000000e+00> : vector<14x84xf32>
    %41 = tpu.matmul %40, %39, %cst_25 {dimension_numbers = #tpu.dot_dimension_numbers<[1], [0], [0], [1], [0, 0, 1, 1], [], []>} : vector<14x168xbf16>, vector<168x84xbf16>, vector<14x84xf32> -> vector<14x84xf32>
    %c0_26 = arith.constant 0 : index
    %c0_27 = arith.constant 0 : index
    %42 = vector.load %arg7[%c0_26, %c0_27] : memref<1x160xf32, #tpu.memory_space<vmem>>, vector<1x160xf32>
    %43 = vector.extract_strided_slice %41 {offsets = [0, 0], sizes = [10, 84], strides = [1, 1]} : vector<14x84xf32> to vector<10x84xf32>
    %c0_28 = arith.constant 0 : index
    %c0_29 = arith.constant 0 : index
    %c0_30 = arith.constant 0 : index
    %44 = vector.load %arg6[%c0_28, %c0_29, %c0_30] : memref<5x84x160xbf16, #tpu.memory_space<vmem>>, vector<1x84x160xbf16>
    %45 = vector.shape_cast %44 : vector<1x84x160xbf16> to vector<84x160xbf16>
    %46 = arith.truncf %43 : vector<10x84xf32> to vector<10x84xbf16>
    %cst_31 = arith.constant dense<0.000000e+00> : vector<10x160xf32>
    %47 = tpu.matmul %46, %45, %cst_31 {dimension_numbers = #tpu.dot_dimension_numbers<[1], [0], [0], [1], [0, 0, 1, 1], [], []>} : vector<10x84xbf16>, vector<84x160xbf16>, vector<10x160xf32> -> vector<10x160xf32>
    %48 = vector.broadcast %42 : vector<1x160xf32> to vector<10x160xf32>
    %49 = arith.addf %48, %47 : vector<10x160xf32>
    %50 = vector.extract_strided_slice %41 {offsets = [1, 0], sizes = [10, 84], strides = [1, 1]} : vector<14x84xf32> to vector<10x84xf32>
    %c1_32 = arith.constant 1 : index
    %c0_33 = arith.constant 0 : index
    %c0_34 = arith.constant 0 : index
    %51 = vector.load %arg6[%c1_32, %c0_33, %c0_34] : memref<5x84x160xbf16, #tpu.memory_space<vmem>>, vector<1x84x160xbf16>
    %52 = vector.shape_cast %51 : vector<1x84x160xbf16> to vector<84x160xbf16>
    %53 = arith.truncf %50 : vector<10x84xf32> to vector<10x84xbf16>
    %cst_35 = arith.constant dense<0.000000e+00> : vector<10x160xf32>
    %54 = tpu.matmul %53, %52, %cst_35 {dimension_numbers = #tpu.dot_dimension_numbers<[1], [0], [0], [1], [0, 0, 1, 1], [], []>} : vector<10x84xbf16>, vector<84x160xbf16>, vector<10x160xf32> -> vector<10x160xf32>
    %55 = arith.addf %49, %54 : vector<10x160xf32>
    %56 = vector.extract_strided_slice %41 {offsets = [2, 0], sizes = [10, 84], strides = [1, 1]} : vector<14x84xf32> to vector<10x84xf32>
    %c2_36 = arith.constant 2 : index
    %c0_37 = arith.constant 0 : index
    %c0_38 = arith.constant 0 : index
    %57 = vector.load %arg6[%c2_36, %c0_37, %c0_38] : memref<5x84x160xbf16, #tpu.memory_space<vmem>>, vector<1x84x160xbf16>
    %58 = vector.shape_cast %57 : vector<1x84x160xbf16> to vector<84x160xbf16>
    %59 = arith.truncf %56 : vector<10x84xf32> to vector<10x84xbf16>
    %cst_39 = arith.constant dense<0.000000e+00> : vector<10x160xf32>
    %60 = tpu.matmul %59, %58, %cst_39 {dimension_numbers = #tpu.dot_dimension_numbers<[1], [0], [0], [1], [0, 0, 1, 1], [], []>} : vector<10x84xbf16>, vector<84x160xbf16>, vector<10x160xf32> -> vector<10x160xf32>
    %61 = arith.addf %55, %60 : vector<10x160xf32>
    %62 = vector.extract_strided_slice %41 {offsets = [3, 0], sizes = [10, 84], strides = [1, 1]} : vector<14x84xf32> to vector<10x84xf32>
    %c3_40 = arith.constant 3 : index
    %c0_41 = arith.constant 0 : index
    %c0_42 = arith.constant 0 : index
    %63 = vector.load %arg6[%c3_40, %c0_41, %c0_42] : memref<5x84x160xbf16, #tpu.memory_space<vmem>>, vector<1x84x160xbf16>
    %64 = vector.shape_cast %63 : vector<1x84x160xbf16> to vector<84x160xbf16>
    %65 = arith.truncf %62 : vector<10x84xf32> to vector<10x84xbf16>
    %cst_43 = arith.constant dense<0.000000e+00> : vector<10x160xf32>
    %66 = tpu.matmul %65, %64, %cst_43 {dimension_numbers = #tpu.dot_dimension_numbers<[1], [0], [0], [1], [0, 0, 1, 1], [], []>} : vector<10x84xbf16>, vector<84x160xbf16>, vector<10x160xf32> -> vector<10x160xf32>
    %67 = arith.addf %61, %66 : vector<10x160xf32>
    %68 = vector.extract_strided_slice %41 {offsets = [4, 0], sizes = [10, 84], strides = [1, 1]} : vector<14x84xf32> to vector<10x84xf32>
    %c4_44 = arith.constant 4 : index
    %c0_45 = arith.constant 0 : index
    %c0_46 = arith.constant 0 : index
    %69 = vector.load %arg6[%c4_44, %c0_45, %c0_46] : memref<5x84x160xbf16, #tpu.memory_space<vmem>>, vector<1x84x160xbf16>
    %70 = vector.shape_cast %69 : vector<1x84x160xbf16> to vector<84x160xbf16>
    %71 = arith.truncf %68 : vector<10x84xf32> to vector<10x84xbf16>
    %cst_47 = arith.constant dense<0.000000e+00> : vector<10x160xf32>
    %72 = tpu.matmul %71, %70, %cst_47 {dimension_numbers = #tpu.dot_dimension_numbers<[1], [0], [0], [1], [0, 0, 1, 1], [], []>} : vector<10x84xbf16>, vector<84x160xbf16>, vector<10x160xf32> -> vector<10x160xf32>
    %73 = arith.addf %67, %72 : vector<10x160xf32>
    %cst_48 = arith.constant 0.000000e+00 : f32
    %74 = vector.broadcast %cst_48 : f32 to vector<10x160xf32>
    %75 = arith.maximumf %73, %74 : vector<10x160xf32>
    %c0_49 = arith.constant 0 : index
    %c0_50 = arith.constant 0 : index
    %76 = vector.load %arg8[%c0_49, %c0_50] : memref<5x10xbf16, #tpu.memory_space<vmem>>, vector<5x10xbf16>
    %77 = arith.truncf %75 : vector<10x160xf32> to vector<10x160xbf16>
    %cst_51 = arith.constant dense<0.000000e+00> : vector<5x160xf32>
    %78 = tpu.matmul %76, %77, %cst_51 {dimension_numbers = #tpu.dot_dimension_numbers<[1], [0], [0], [1], [0, 0, 1, 1], [], []>} : vector<5x10xbf16>, vector<10x160xbf16>, vector<5x160xf32> -> vector<5x160xf32>
    %c0_52 = arith.constant 0 : index
    %c0_53 = arith.constant 0 : index
    %79 = vector.load %arg9[%c0_52, %c0_53] : memref<160x80xbf16, #tpu.memory_space<vmem>>, vector<160x80xbf16>
    %80 = arith.truncf %78 : vector<5x160xf32> to vector<5x160xbf16>
    %cst_54 = arith.constant dense<0.000000e+00> : vector<5x80xf32>
    %81 = tpu.matmul %80, %79, %cst_54 {dimension_numbers = #tpu.dot_dimension_numbers<[1], [0], [0], [1], [0, 0, 1, 1], [], []>} : vector<5x160xbf16>, vector<160x80xbf16>, vector<5x80xf32> -> vector<5x80xf32>
    %c0_55 = arith.constant 0 : index
    %c0_56 = arith.constant 0 : index
    %82 = vector.load %arg11[%c0_55, %c0_56] : memref<1x120xf32, #tpu.memory_space<vmem>>, vector<1x120xf32>
    %83 = vector.extract_strided_slice %81 {offsets = [0, 0], sizes = [1, 80], strides = [1, 1]} : vector<5x80xf32> to vector<1x80xf32>
    %c0_57 = arith.constant 0 : index
    %c0_58 = arith.constant 0 : index
    %c0_59 = arith.constant 0 : index
    %84 = vector.load %arg10[%c0_57, %c0_58, %c0_59] : memref<5x80x120xbf16, #tpu.memory_space<vmem>>, vector<1x80x120xbf16>
    %85 = vector.shape_cast %84 : vector<1x80x120xbf16> to vector<80x120xbf16>
    %86 = arith.truncf %83 : vector<1x80xf32> to vector<1x80xbf16>
    %cst_60 = arith.constant dense<0.000000e+00> : vector<1x120xf32>
    %87 = tpu.matmul %86, %85, %cst_60 {dimension_numbers = #tpu.dot_dimension_numbers<[1], [0], [0], [1], [0, 0, 1, 1], [], []>} : vector<1x80xbf16>, vector<80x120xbf16>, vector<1x120xf32> -> vector<1x120xf32>
    %88 = arith.addf %82, %87 : vector<1x120xf32>
    %89 = vector.extract_strided_slice %81 {offsets = [1, 0], sizes = [1, 80], strides = [1, 1]} : vector<5x80xf32> to vector<1x80xf32>
    %c1_61 = arith.constant 1 : index
    %c0_62 = arith.constant 0 : index
    %c0_63 = arith.constant 0 : index
    %90 = vector.load %arg10[%c1_61, %c0_62, %c0_63] : memref<5x80x120xbf16, #tpu.memory_space<vmem>>, vector<1x80x120xbf16>
    %91 = vector.shape_cast %90 : vector<1x80x120xbf16> to vector<80x120xbf16>
    %92 = arith.truncf %89 : vector<1x80xf32> to vector<1x80xbf16>
    %cst_64 = arith.constant dense<0.000000e+00> : vector<1x120xf32>
    %93 = tpu.matmul %92, %91, %cst_64 {dimension_numbers = #tpu.dot_dimension_numbers<[1], [0], [0], [1], [0, 0, 1, 1], [], []>} : vector<1x80xbf16>, vector<80x120xbf16>, vector<1x120xf32> -> vector<1x120xf32>
    %94 = arith.addf %88, %93 : vector<1x120xf32>
    %95 = vector.extract_strided_slice %81 {offsets = [2, 0], sizes = [1, 80], strides = [1, 1]} : vector<5x80xf32> to vector<1x80xf32>
    %c2_65 = arith.constant 2 : index
    %c0_66 = arith.constant 0 : index
    %c0_67 = arith.constant 0 : index
    %96 = vector.load %arg10[%c2_65, %c0_66, %c0_67] : memref<5x80x120xbf16, #tpu.memory_space<vmem>>, vector<1x80x120xbf16>
    %97 = vector.shape_cast %96 : vector<1x80x120xbf16> to vector<80x120xbf16>
    %98 = arith.truncf %95 : vector<1x80xf32> to vector<1x80xbf16>
    %cst_68 = arith.constant dense<0.000000e+00> : vector<1x120xf32>
    %99 = tpu.matmul %98, %97, %cst_68 {dimension_numbers = #tpu.dot_dimension_numbers<[1], [0], [0], [1], [0, 0, 1, 1], [], []>} : vector<1x80xbf16>, vector<80x120xbf16>, vector<1x120xf32> -> vector<1x120xf32>
    %100 = arith.addf %94, %99 : vector<1x120xf32>
    %101 = vector.extract_strided_slice %81 {offsets = [3, 0], sizes = [1, 80], strides = [1, 1]} : vector<5x80xf32> to vector<1x80xf32>
    %c3_69 = arith.constant 3 : index
    %c0_70 = arith.constant 0 : index
    %c0_71 = arith.constant 0 : index
    %102 = vector.load %arg10[%c3_69, %c0_70, %c0_71] : memref<5x80x120xbf16, #tpu.memory_space<vmem>>, vector<1x80x120xbf16>
    %103 = vector.shape_cast %102 : vector<1x80x120xbf16> to vector<80x120xbf16>
    %104 = arith.truncf %101 : vector<1x80xf32> to vector<1x80xbf16>
    %cst_72 = arith.constant dense<0.000000e+00> : vector<1x120xf32>
    %105 = tpu.matmul %104, %103, %cst_72 {dimension_numbers = #tpu.dot_dimension_numbers<[1], [0], [0], [1], [0, 0, 1, 1], [], []>} : vector<1x80xbf16>, vector<80x120xbf16>, vector<1x120xf32> -> vector<1x120xf32>
    %106 = arith.addf %100, %105 : vector<1x120xf32>
    %107 = vector.extract_strided_slice %81 {offsets = [4, 0], sizes = [1, 80], strides = [1, 1]} : vector<5x80xf32> to vector<1x80xf32>
    %c4_73 = arith.constant 4 : index
    %c0_74 = arith.constant 0 : index
    %c0_75 = arith.constant 0 : index
    %108 = vector.load %arg10[%c4_73, %c0_74, %c0_75] : memref<5x80x120xbf16, #tpu.memory_space<vmem>>, vector<1x80x120xbf16>
    %109 = vector.shape_cast %108 : vector<1x80x120xbf16> to vector<80x120xbf16>
    %110 = arith.truncf %107 : vector<1x80xf32> to vector<1x80xbf16>
    %cst_76 = arith.constant dense<0.000000e+00> : vector<1x120xf32>
    %111 = tpu.matmul %110, %109, %cst_76 {dimension_numbers = #tpu.dot_dimension_numbers<[1], [0], [0], [1], [0, 0, 1, 1], [], []>} : vector<1x80xbf16>, vector<80x120xbf16>, vector<1x120xf32> -> vector<1x120xf32>
    %112 = arith.addf %106, %111 : vector<1x120xf32>
    %cst_77 = arith.constant 0.000000e+00 : f32
    %113 = vector.broadcast %cst_77 : f32 to vector<1x120xf32>
    %114 = arith.maximumf %112, %113 : vector<1x120xf32>
    %c0_78 = arith.constant 0 : index
    %c0_79 = arith.constant 0 : index
    %115 = vector.load %arg12[%c0_78, %c0_79] : memref<120x84xbf16, #tpu.memory_space<vmem>>, vector<120x84xbf16>
    %116 = arith.truncf %114 : vector<1x120xf32> to vector<1x120xbf16>
    %cst_80 = arith.constant dense<0.000000e+00> : vector<1x84xf32>
    %117 = tpu.matmul %116, %115, %cst_80 {dimension_numbers = #tpu.dot_dimension_numbers<[1], [0], [0], [1], [0, 0, 1, 1], [], []>} : vector<1x120xbf16>, vector<120x84xbf16>, vector<1x84xf32> -> vector<1x84xf32>
    %c0_81 = arith.constant 0 : index
    %c0_82 = arith.constant 0 : index
    %118 = vector.load %arg13[%c0_81, %c0_82] : memref<1x84xf32, #tpu.memory_space<vmem>>, vector<1x84xf32>
    %119 = arith.addf %117, %118 : vector<1x84xf32>
    %cst_83 = arith.constant 0.000000e+00 : f32
    %120 = vector.broadcast %cst_83 : f32 to vector<1x84xf32>
    %121 = arith.maximumf %119, %120 : vector<1x84xf32>
    %c0_84 = arith.constant 0 : index
    %c0_85 = arith.constant 0 : index
    %122 = vector.load %arg14[%c0_84, %c0_85] : memref<84x10xbf16, #tpu.memory_space<vmem>>, vector<84x10xbf16>
    %123 = arith.truncf %121 : vector<1x84xf32> to vector<1x84xbf16>
    %cst_86 = arith.constant dense<0.000000e+00> : vector<1x10xf32>
    %124 = tpu.matmul %123, %122, %cst_86 {dimension_numbers = #tpu.dot_dimension_numbers<[1], [0], [0], [1], [0, 0, 1, 1], [], []>} : vector<1x84xbf16>, vector<84x10xbf16>, vector<1x10xf32> -> vector<1x10xf32>
    %c0_87 = arith.constant 0 : index
    %c0_88 = arith.constant 0 : index
    %125 = vector.load %arg15[%c0_87, %c0_88] : memref<1x10xf32, #tpu.memory_space<vmem>>, vector<1x10xf32>
    %126 = arith.addf %124, %125 : vector<1x10xf32>
    %c0_89 = arith.constant 0 : index
    %c0_90 = arith.constant 0 : index
    %c0_91 = arith.constant 0 : index
    %127 = vector.load %arg16[%c0_89, %c0_90, %c0_91] : memref<1x1x10xf32, #tpu.memory_space<vmem>>, vector<1x1x10xf32>
    %128 = vector.shape_cast %127 : vector<1x1x10xf32> to vector<1x10xf32>
    %129 = vector.shape_cast %126 : vector<1x10xf32> to vector<1x1x10xf32>
    tpu.vector_store %arg16[%c0_89, %c0_90, %c0_91], %129 {strides = array<i32>} : memref<1x1x10xf32, #tpu.memory_space<vmem>>, vector<1x1x10xf32>,
    return
  }
  func.func @transform_0(%arg0: i32) -> (i32, i32, i32) {
    %c0_i32 = arith.constant 0 : i32
    %c0_i32_0 = arith.constant 0 : i32
    %c0_i32_1 = arith.constant 0 : i32
    return %arg0, %c0_i32, %c0_i32_0 : i32, i32, i32
  }
  func.func @transform_1(%arg0: i32) -> (i32, i32, i32) {
    %c0_i32 = arith.constant 0 : i32
    %c0_i32_0 = arith.constant 0 : i32
    %c0_i32_1 = arith.constant 0 : i32
    %c0_i32_2 = arith.constant 0 : i32
    return %c0_i32, %c0_i32_0, %c0_i32_1 : i32, i32, i32
  }
  func.func @transform_2(%arg0: i32) -> (i32, i32) {
    %c0_i32 = arith.constant 0 : i32
    %c0_i32_0 = arith.constant 0 : i32
    %c0_i32_1 = arith.constant 0 : i32
    return %c0_i32, %c0_i32_0 : i32, i32
  }
  func.func @transform_3(%arg0: i32) -> (i32, i32) {
    %c0_i32 = arith.constant 0 : i32
    %c0_i32_0 = arith.constant 0 : i32
    %c0_i32_1 = arith.constant 0 : i32
    return %c0_i32, %c0_i32_0 : i32, i32
  }
  func.func @transform_4(%arg0: i32) -> (i32, i32) {
    %c0_i32 = arith.constant 0 : i32
    %c0_i32_0 = arith.constant 0 : i32
    %c0_i32_1 = arith.constant 0 : i32
    return %c0_i32, %c0_i32_0 : i32, i32
  }
  func.func @transform_5(%arg0: i32) -> (i32, i32, i32) {
    %c0_i32 = arith.constant 0 : i32
    %c0_i32_0 = arith.constant 0 : i32
    %c0_i32_1 = arith.constant 0 : i32
    %c0_i32_2 = arith.constant 0 : i32
    return %c0_i32, %c0_i32_0, %c0_i32_1 : i32, i32, i32
  }
  func.func @transform_6(%arg0: i32) -> (i32, i32) {
    %c0_i32 = arith.constant 0 : i32
    %c0_i32_0 = arith.constant 0 : i32
    %c0_i32_1 = arith.constant 0 : i32
    return %c0_i32, %c0_i32_0 : i32, i32
  }
  func.func @transform_7(%arg0: i32) -> (i32, i32) {
    %c0_i32 = arith.constant 0 : i32
    %c0_i32_0 = arith.constant 0 : i32
    %c0_i32_1 = arith.constant 0 : i32
    return %c0_i32, %c0_i32_0 : i32, i32
  }
  func.func @transform_8(%arg0: i32) -> (i32, i32) {
    %c0_i32 = arith.constant 0 : i32
    %c0_i32_0 = arith.constant 0 : i32
    %c0_i32_1 = arith.constant 0 : i32
    return %c0_i32, %c0_i32_0 : i32, i32
  }
  func.func @transform_9(%arg0: i32) -> (i32, i32, i32) {
    %c0_i32 = arith.constant 0 : i32
    %c0_i32_0 = arith.constant 0 : i32
    %c0_i32_1 = arith.constant 0 : i32
    %c0_i32_2 = arith.constant 0 : i32
    return %c0_i32, %c0_i32_0, %c0_i32_1 : i32, i32, i32
  }
  func.func @transform_10(%arg0: i32) -> (i32, i32) {
    %c0_i32 = arith.constant 0 : i32
    %c0_i32_0 = arith.constant 0 : i32
    %c0_i32_1 = arith.constant 0 : i32
    return %c0_i32, %c0_i32_0 : i32, i32
  }
  func.func @transform_11(%arg0: i32) -> (i32, i32) {
    %c0_i32 = arith.constant 0 : i32
    %c0_i32_0 = arith.constant 0 : i32
    %c0_i32_1 = arith.constant 0 : i32
    return %c0_i32, %c0_i32_0 : i32, i32
  }
  func.func @transform_12(%arg0: i32) -> (i32, i32) {
    %c0_i32 = arith.constant 0 : i32
    %c0_i32_0 = arith.constant 0 : i32
    %c0_i32_1 = arith.constant 0 : i32
    return %c0_i32, %c0_i32_0 : i32, i32
  }
  func.func @transform_13(%arg0: i32) -> (i32, i32) {
    %c0_i32 = arith.constant 0 : i32
    %c0_i32_0 = arith.constant 0 : i32
    %c0_i32_1 = arith.constant 0 : i32
    return %c0_i32, %c0_i32_0 : i32, i32
  }
  func.func @transform_14(%arg0: i32) -> (i32, i32) {
    %c0_i32 = arith.constant 0 : i32
    %c0_i32_0 = arith.constant 0 : i32
    %c0_i32_1 = arith.constant 0 : i32
    return %c0_i32, %c0_i32_0 : i32, i32
  }
  func.func @transform_15(%arg0: i32) -> (i32, i32, i32) {
    %c0_i32 = arith.constant 0 : i32
    %c0_i32_0 = arith.constant 0 : i32
    %c0_i32_1 = arith.constant 0 : i32
    return %arg0, %c0_i32, %c0_i32_0 : i32, i32, i32
  }
}

</mosaic_0001>

<llo_original>
// kernel: lenet_forward.1
$region0: #{lenet_forward.1}
  #allocation0 [shape = 'u32[]', space=smem, size = 0x4, offset = 0x4, fixed_abs, tag = 'smem constant byte address 0x4 - core index']
  #allocation1 [shape = 'u32[144,128]{1,0:T(1,128)}', space=vmem, size = 0x12000, scoped, tag = 'internal scratch']
  %s0 = inlined_call_operand.vmem [shape: f32[2,32,32], index: 0, kind: input, shape index: {}]
  %s1 = inlined_call_operand.vmem [shape: bf16[5,32,168], index: 1, kind: input, shape index: {}]
  %s2 = inlined_call_operand.vmem [shape: f32[1,168], index: 2, kind: input, shape index: {}]
  %s3 = inlined_call_operand.vmem [shape: bf16[14,28], index: 3, kind: input, shape index: {}]
  %s4 = inlined_call_operand.vmem [shape: bf16[168,84], index: 4, kind: input, shape index: {}]
  %s5 = inlined_call_operand.vmem [shape: bf16[5,84,160], index: 5, kind: input, shape index: {}]
  %s6 = inlined_call_operand.vmem [shape: f32[1,160], index: 6, kind: input, shape index: {}]
  %s7 = inlined_call_operand.vmem [shape: bf16[5,10], index: 7, kind: input, shape index: {}]
  %s8 = inlined_call_operand.vmem [shape: bf16[160,80], index: 8, kind: input, shape index: {}]
  %s9 = inlined_call_operand.vmem [shape: bf16[5,80,120], index: 9, kind: input, shape index: {}]
  %s10 = inlined_call_operand.vmem [shape: f32[1,120], index: 10, kind: input, shape index: {}]
  %s11 = inlined_call_operand.vmem [shape: bf16[120,84], index: 11, kind: input, shape index: {}]
  %s12 = inlined_call_operand.vmem [shape: f32[1,84], index: 12, kind: input, shape index: {}]
  %s13 = inlined_call_operand.vmem [shape: bf16[84,10], index: 13, kind: input, shape index: {}]
  %s14 = inlined_call_operand.vmem [shape: f32[1,10], index: 14, kind: input, shape index: {}]
  %s15 = inlined_call_operand.hbm [shape: f32[2,1,10], index: 15, kind: output, shape index: {}]
  %s16 = sld [smem:[#allocation0]]
  $region93: #{lenet_forward.1} parent=0
    _
  %s18 = ssub.s32 1, %s16
  %s19 = scalar_select 0, %s18, %s16
  $region1: #{lenet_forward.1} parent=0
    #allocation2 [shape = 'u8[1024]{0}', space=vmem, size = 0x400, scoped, tag = 'output window, operand 0']
    #allocation3 [shape = 's32[2]{0}', space=sflag, size = 0x8, scoped, tag = 'scoped memory for lenet_forward.1']
    %20 = vsyncpa [#allocation3], 0
    %s21 = scalar_lea.sflag [#allocation3], 1
    %22 = vsyncpa %s21, 0
    loop: start=0, step=1, limit=4
    $region2: #{lenet_forward.1} parent=1 // loop_pre_header
      _
    $region3: #{lenet_forward.1} parent=1 // loop_header
      %s24 = sphi 0, %s28
      %p25 = scmp.ge.s32.totalorder %s24, 4
      %s34 = sphi 0, %s36
      %s37 = sphi 0, %s34
      %s38 = sphi 0, %s37
      %s54 = sphi 0, %s38
      %s58 = sphi 0, %s58
      %s60 = sphi 0, %s58
      %s61 = sphi 0, %s60
      %s75 = sphi 0, %s61
      %s79 = sphi 0, %s79
      %s81 = sphi 0, %s79
      %s82 = sphi 0, %s81
      %s96 = sphi 0, %s82
      %s100 = sphi 0, %s100
      %s102 = sphi 0, %s100
      %s103 = sphi 0, %s102
      %s117 = sphi 0, %s103
      %s121 = sphi 0, %s121
      %s123 = sphi 0, %s121
      %s124 = sphi 0, %s123
      %s138 = sphi 0, %s124
      %s142 = sphi 0, %s142
      %s144 = sphi 0, %s142
      %s145 = sphi 0, %s144
      %s159 = sphi 0, %s145
      %s163 = sphi 0, %s163
      %s165 = sphi 0, %s163
      %s166 = sphi 0, %s165
      %s180 = sphi 0, %s166
      %s184 = sphi 0, %s184
      %s186 = sphi 0, %s184
      %s187 = sphi 0, %s186
      %s201 = sphi 0, %s187
      %s205 = sphi 0, %s205
      %s207 = sphi 0, %s205
      %s208 = sphi 0, %s207
      %s222 = sphi 0, %s208
      %s226 = sphi 0, %s226
      %s228 = sphi 0, %s226
      %s229 = sphi 0, %s228
      %s243 = sphi 0, %s229
      %s247 = sphi 0, %s247
      %s249 = sphi 0, %s247
      %s250 = sphi 0, %s249
      %s264 = sphi 0, %s250
      %s268 = sphi 0, %s268
      %s270 = sphi 0, %s268
      %s271 = sphi 0, %s270
      %s285 = sphi 0, %s271
      %s289 = sphi 0, %s289
      %s291 = sphi 0, %s289
      %s292 = sphi 0, %s291
      %s306 = sphi 0, %s292
      %s310 = sphi 0, %s310
      %s312 = sphi 0, %s310
      %s313 = sphi 0, %s312
      %s327 = sphi 0, %s313
      %s331 = sphi 0, %s331
      %s333 = sphi 0, %s331
      %s334 = sphi 0, %s333
      %s348 = sphi 0, %s334
      %s354 = sphi 0, %s356
      %s357 = sphi 0, %s354
      %s358 = sphi 0, %s357
      %s374 = sphi 0, %s358
    $region4: #{lenet_forward.1} parent=1 // loop_header_branch
      %27 = sbr.rel (%p25) target = $region8
    $region5: #{lenet_forward.1} parent=1 // loop_body
      %s29 = ssub.s32 %s24, 1
      %s30 = ssub.s32 %s24, 2
      %s31 = sadd.s32 %s24, 1
      %s32 = ssub.s32 %s24, %s31
      %p33 = scmp.eq.s32.totalorder %s32, 0
      %s35 = sadd.s32 %s34, 1
      %s36 = scalar_select %p33, %s34, %s35
      %p39 = pneg %p33
      %p40 = scmp.eq.s32.totalorder %s24, 1
      %p41 = por %p39, %p40
      %p42 = scmp.ne.s32.totalorder %s34, %s37
      %p43 = scmp.eq.s32.totalorder %s24, 0
      %p44 = por %p42, %p43
      %p45 = scmp.ne.s32.totalorder %s34, %s37
      %p46 = scmp.eq.s32.totalorder %s29, 1
      %p47 = por %p45, %p46
      %p48 = scmp.ne.s32.totalorder %s37, %s38
      %p49 = scmp.eq.s32.totalorder %s29, 0
      %p50 = por %p48, %p49
      %p51 = scmp.ne.s32.totalorder %s37, %s38
      %p52 = scmp.eq.s32.totalorder %s30, 1
      %p53 = por %p51, %p52
      %p55 = scmp.ne.s32.totalorder %s38, %s54
      %p56 = scmp.eq.s32.totalorder %s30, 0
      %p57 = por %p55, %p56
      %s59 = sadd.s32 %s58, 1
      %p62 = scmp.eq.s32.totalorder %s24, 1
      %p63 = scmp.ne.s32.totalorder %s58, %s60
      %p64 = scmp.eq.s32.totalorder %s24, 0
      %p65 = por %p63, %p64
      %p66 = scmp.ne.s32.totalorder %s58, %s60
      %p67 = scmp.eq.s32.totalorder %s29, 1
      %p68 = por %p66, %p67
      %p69 = scmp.ne.s32.totalorder %s60, %s61
      %p70 = scmp.eq.s32.totalorder %s29, 0
      %p71 = por %p69, %p70
      %p72 = scmp.ne.s32.totalorder %s60, %s61
      %p73 = scmp.eq.s32.totalorder %s30, 1
      %p74 = por %p72, %p73
      %p76 = scmp.ne.s32.totalorder %s61, %s75
      %p77 = scmp.eq.s32.totalorder %s30, 0
      %p78 = por %p76, %p77
      %s80 = sadd.s32 %s79, 1
      %p83 = scmp.eq.s32.totalorder %s24, 1
      %p84 = scmp.ne.s32.totalorder %s79, %s81
      %p85 = scmp.eq.s32.totalorder %s24, 0
      %p86 = por %p84, %p85
      %p87 = scmp.ne.s32.totalorder %s79, %s81
      %p88 = scmp.eq.s32.totalorder %s29, 1
      %p89 = por %p87, %p88
      %p90 = scmp.ne.s32.totalorder %s81, %s82
      %p91 = scmp.eq.s32.totalorder %s29, 0
      %p92 = por %p90, %p91
      %p93 = scmp.ne.s32.totalorder %s81, %s82
      %p94 = scmp.eq.s32.totalorder %s30, 1
      %p95 = por %p93, %p94
      %p97 = scmp.ne.s32.totalorder %s82, %s96
      %p98 = scmp.eq.s32.totalorder %s30, 0
      %p99 = por %p97, %p98
      %s101 = sadd.s32 %s100, 1
      %p104 = scmp.eq.s32.totalorder %s24, 1
      %p105 = scmp.ne.s32.totalorder %s100, %s102
      %p106 = scmp.eq.s32.totalorder %s24, 0
      %p107 = por %p105, %p106
      %p108 = scmp.ne.s32.totalorder %s100, %s102
      %p109 = scmp.eq.s32.totalorder %s29, 1
      %p110 = por %p108, %p109
      %p111 = scmp.ne.s32.totalorder %s102, %s103
      %p112 = scmp.eq.s32.totalorder %s29, 0
      %p113 = por %p111, %p112
      %p114 = scmp.ne.s32.totalorder %s102, %s103
      %p115 = scmp.eq.s32.totalorder %s30, 1
      %p116 = por %p114, %p115
      %p118 = scmp.ne.s32.totalorder %s103, %s117
      %p119 = scmp.eq.s32.totalorder %s30, 0
      %p120 = por %p118, %p119
      %s122 = sadd.s32 %s121, 1
      %p125 = scmp.eq.s32.totalorder %s24, 1
      %p126 = scmp.ne.s32.totalorder %s121, %s123
      %p127 = scmp.eq.s32.totalorder %s24, 0
      %p128 = por %p126, %p127
      %p129 = scmp.ne.s32.totalorder %s121, %s123
      %p130 = scmp.eq.s32.totalorder %s29, 1
      %p131 = por %p129, %p130
      %p132 = scmp.ne.s32.totalorder %s123, %s124
      %p133 = scmp.eq.s32.totalorder %s29, 0
      %p134 = por %p132, %p133
      %p135 = scmp.ne.s32.totalorder %s123, %s124
      %p136 = scmp.eq.s32.totalorder %s30, 1
      %p137 = por %p135, %p136
      %p139 = scmp.ne.s32.totalorder %s124, %s138
      %p140 = scmp.eq.s32.totalorder %s30, 0
      %p141 = por %p139, %p140
      %s143 = sadd.s32 %s142, 1
      %p146 = scmp.eq.s32.totalorder %s24, 1
      %p147 = scmp.ne.s32.totalorder %s142, %s144
      %p148 = scmp.eq.s32.totalorder %s24, 0
      %p149 = por %p147, %p148
      %p150 = scmp.ne.s32.totalorder %s142, %s144
      %p151 = scmp.eq.s32.totalorder %s29, 1
      %p152 = por %p150, %p151
      %p153 = scmp.ne.s32.totalorder %s144, %s145
      %p154 = scmp.eq.s32.totalorder %s29, 0
      %p155 = por %p153, %p154
      %p156 = scmp.ne.s32.totalorder %s144, %s145
      %p157 = scmp.eq.s32.totalorder %s30, 1
      %p158 = por %p156, %p157
      %p160 = scmp.ne.s32.totalorder %s145, %s159
      %p161 = scmp.eq.s32.totalorder %s30, 0
      %p162 = por %p160, %p161
      %s164 = sadd.s32 %s163, 1
      %p167 = scmp.eq.s32.totalorder %s24, 1
      %p168 = scmp.ne.s32.totalorder %s163, %s165
      %p169 = scmp.eq.s32.totalorder %s24, 0
      %p170 = por %p168, %p169
      %p171 = scmp.ne.s32.totalorder %s163, %s165
      %p172 = scmp.eq.s32.totalorder %s29, 1
      %p173 = por %p171, %p172
      %p174 = scmp.ne.s32.totalorder %s165, %s166
      %p175 = scmp.eq.s32.totalorder %s29, 0
      %p176 = por %p174, %p175
      %p177 = scmp.ne.s32.totalorder %s165, %s166
      %p178 = scmp.eq.s32.totalorder %s30, 1
      %p179 = por %p177, %p178
      %p181 = scmp.ne.s32.totalorder %s166, %s180
      %p182 = scmp.eq.s32.totalorder %s30, 0
      %p183 = por %p181, %p182
      %s185 = sadd.s32 %s184, 1
      %p188 = scmp.eq.s32.totalorder %s24, 1
      %p189 = scmp.ne.s32.totalorder %s184, %s186
      %p190 = scmp.eq.s32.totalorder %s24, 0
      %p191 = por %p189, %p190
      %p192 = scmp.ne.s32.totalorder %s184, %s186
      %p193 = scmp.eq.s32.totalorder %s29, 1
      %p194 = por %p192, %p193
      %p195 = scmp.ne.s32.totalorder %s186, %s187
      %p196 = scmp.eq.s32.totalorder %s29, 0
      %p197 = por %p195, %p196
      %p198 = scmp.ne.s32.totalorder %s186, %s187
      %p199 = scmp.eq.s32.totalorder %s30, 1
      %p200 = por %p198, %p199
      %p202 = scmp.ne.s32.totalorder %s187, %s201
      %p203 = scmp.eq.s32.totalorder %s30, 0
      %p204 = por %p202, %p203
      %s206 = sadd.s32 %s205, 1
      %p209 = scmp.eq.s32.totalorder %s24, 1
      %p210 = scmp.ne.s32.totalorder %s205, %s207
      %p211 = scmp.eq.s32.totalorder %s24, 0
      %p212 = por %p210, %p211
      %p213 = scmp.ne.s32.totalorder %s205, %s207
      %p214 = scmp.eq.s32.totalorder %s29, 1
      %p215 = por %p213, %p214
      %p216 = scmp.ne.s32.totalorder %s207, %s208
      %p217 = scmp.eq.s32.totalorder %s29, 0
      %p218 = por %p216, %p217
      %p219 = scmp.ne.s32.totalorder %s207, %s208
      %p220 = scmp.eq.s32.totalorder %s30, 1
      %p221 = por %p219, %p220
      %p223 = scmp.ne.s32.totalorder %s208, %s222
      %p224 = scmp.eq.s32.totalorder %s30, 0
      %p225 = por %p223, %p224
      %s227 = sadd.s32 %s226, 1
      %p230 = scmp.eq.s32.totalorder %s24, 1
      %p231 = scmp.ne.s32.totalorder %s226, %s228
      %p232 = scmp.eq.s32.totalorder %s24, 0
      %p233 = por %p231, %p232
      %p234 = scmp.ne.s32.totalorder %s226, %s228
      %p235 = scmp.eq.s32.totalorder %s29, 1
      %p236 = por %p234, %p235
      %p237 = scmp.ne.s32.totalorder %s228, %s229
      %p238 = scmp.eq.s32.totalorder %s29, 0
      %p239 = por %p237, %p238
      %p240 = scmp.ne.s32.totalorder %s228, %s229
      %p241 = scmp.eq.s32.totalorder %s30, 1
      %p242 = por %p240, %p241
      %p244 = scmp.ne.s32.totalorder %s229, %s243
      %p245 = scmp.eq.s32.totalorder %s30, 0
      %p246 = por %p244, %p245
      %s248 = sadd.s32 %s247, 1
      %p251 = scmp.eq.s32.totalorder %s24, 1
      %p252 = scmp.ne.s32.totalorder %s247, %s249
      %p253 = scmp.eq.s32.totalorder %s24, 0
      %p254 = por %p252, %p253
      %p255 = scmp.ne.s32.totalorder %s247, %s249
      %p256 = scmp.eq.s32.totalorder %s29, 1
      %p257 = por %p255, %p256
      %p258 = scmp.ne.s32.totalorder %s249, %s250
      %p259 = scmp.eq.s32.totalorder %s29, 0
      %p260 = por %p258, %p259
      %p261 = scmp.ne.s32.totalorder %s249, %s250
      %p262 = scmp.eq.s32.totalorder %s30, 1
      %p263 = por %p261, %p262
      %p265 = scmp.ne.s32.totalorder %s250, %s264
      %p266 = scmp.eq.s32.totalorder %s30, 0
      %p267 = por %p265, %p266
      %s269 = sadd.s32 %s268, 1
      %p272 = scmp.eq.s32.totalorder %s24, 1
      %p273 = scmp.ne.s32.totalorder %s268, %s270
      %p274 = scmp.eq.s32.totalorder %s24, 0
      %p275 = por %p273, %p274
      %p276 = scmp.ne.s32.totalorder %s268, %s270
      %p277 = scmp.eq.s32.totalorder %s29, 1
      %p278 = por %p276, %p277
      %p279 = scmp.ne.s32.totalorder %s270, %s271
      %p280 = scmp.eq.s32.totalorder %s29, 0
      %p281 = por %p279, %p280
      %p282 = scmp.ne.s32.totalorder %s270, %s271
      %p283 = scmp.eq.s32.totalorder %s30, 1
      %p284 = por %p282, %p283
      %p286 = scmp.ne.s32.totalorder %s271, %s285
      %p287 = scmp.eq.s32.totalorder %s30, 0
      %p288 = por %p286, %p287
      %s290 = sadd.s32 %s289, 1
      %p293 = scmp.eq.s32.totalorder %s24, 1
      %p294 = scmp.ne.s32.totalorder %s289, %s291
      %p295 = scmp.eq.s32.totalorder %s24, 0
      %p296 = por %p294, %p295
      %p297 = scmp.ne.s32.totalorder %s289, %s291
      %p298 = scmp.eq.s32.totalorder %s29, 1
      %p299 = por %p297, %p298
      %p300 = scmp.ne.s32.totalorder %s291, %s292
      %p301 = scmp.eq.s32.totalorder %s29, 0
      %p302 = por %p300, %p301
      %p303 = scmp.ne.s32.totalorder %s291, %s292
      %p304 = scmp.eq.s32.totalorder %s30, 1
      %p305 = por %p303, %p304
      %p307 = scmp.ne.s32.totalorder %s292, %s306
      %p308 = scmp.eq.s32.totalorder %s30, 0
      %p309 = por %p307, %p308
      %s311 = sadd.s32 %s310, 1
      %p314 = scmp.eq.s32.totalorder %s24, 1
      %p315 = scmp.ne.s32.totalorder %s310, %s312
      %p316 = scmp.eq.s32.totalorder %s24, 0
      %p317 = por %p315, %p316
      %p318 = scmp.ne.s32.totalorder %s310, %s312
      %p319 = scmp.eq.s32.totalorder %s29, 1
      %p320 = por %p318, %p319
      %p321 = scmp.ne.s32.totalorder %s312, %s313
      %p322 = scmp.eq.s32.totalorder %s29, 0
      %p323 = por %p321, %p322
      %p324 = scmp.ne.s32.totalorder %s312, %s313
      %p325 = scmp.eq.s32.totalorder %s30, 1
      %p326 = por %p324, %p325
      %p328 = scmp.ne.s32.totalorder %s313, %s327
      %p329 = scmp.eq.s32.totalorder %s30, 0
      %p330 = por %p328, %p329
      %s332 = sadd.s32 %s331, 1
      %p335 = scmp.eq.s32.totalorder %s24, 1
      %p336 = scmp.ne.s32.totalorder %s331, %s333
      %p337 = scmp.eq.s32.totalorder %s24, 0
      %p338 = por %p336, %p337
      %p339 = scmp.ne.s32.totalorder %s331, %s333
      %p340 = scmp.eq.s32.totalorder %s29, 1
      %p341 = por %p339, %p340
      %p342 = scmp.ne.s32.totalorder %s333, %s334
      %p343 = scmp.eq.s32.totalorder %s29, 0
      %p344 = por %p342, %p343
      %p345 = scmp.ne.s32.totalorder %s333, %s334
      %p346 = scmp.eq.s32.totalorder %s30, 1
      %p347 = por %p345, %p346
      %p349 = scmp.ne.s32.totalorder %s334, %s348
      %p350 = scmp.eq.s32.totalorder %s30, 0
      %p351 = por %p349, %p350
      %s352 = ssub.s32 %s24, %s31
      %p353 = scmp.eq.s32.totalorder %s352, 0
      %s355 = sadd.s32 %s354, 1
      %s356 = scalar_select %p353, %s354, %s355
      %p359 = pneg %p353
      %p360 = scmp.eq.s32.totalorder %s24, 1
      %p361 = por %p359, %p360
      %p362 = scmp.ne.s32.totalorder %s354, %s357
      %p363 = scmp.eq.s32.totalorder %s24, 0
      %p364 = por %p362, %p363
      %p365 = scmp.ne.s32.totalorder %s354, %s357
      %p366 = scmp.eq.s32.totalorder %s29, 1
      %p367 = por %p365, %p366
      %p368 = scmp.ne.s32.totalorder %s357, %s358
      %p369 = scmp.eq.s32.totalorder %s29, 0
      %p370 = por %p368, %p369
      %p371 = scmp.ne.s32.totalorder %s357, %s358
      %p372 = scmp.eq.s32.totalorder %s30, 1
      %p373 = por %p371, %p372
      %p375 = scmp.ne.s32.totalorder %s358, %s374
      %p376 = scmp.eq.s32.totalorder %s30, 0
      %p377 = por %p375, %p376
      %p378 = scmp.le.s32.totalorder 1, %s24
      %p379 = scmp.lt.s32.totalorder %s24, 3
      %p380 = pnand %p378, %p379
      %p381 = pneg %p380
      // Predicated region
      $region9: #{lenet_forward.1} parent=5 // pred_check
        _
      $region10: #{lenet_forward.1} parent=5 // pred_check_branch
        %383 = sbr.rel (%p380) target = $region12
      $region11: #{lenet_forward.1} parent=5 // pred_region
        %s384 = ssub.s32 %s24, 1
        // Predicated region
        $region13: #{lenet_forward.1} parent=11 // pred_check
          %p385 = pneg %p71
        $region14: #{lenet_forward.1} parent=11 // pred_check_branch
          %387 = sbr.rel (%p385) target = $region16
        $region15: #{lenet_forward.1} parent=11 // pred_region
          _
        $region16: #{lenet_forward.1} parent=11 // pred_fallthru
          _
        // Predicated region
        $region17: #{lenet_forward.1} parent=11 // pred_check
          %p388 = pneg %p92
        $region18: #{lenet_forward.1} parent=11 // pred_check_branch
          %390 = sbr.rel (%p388) target = $region20
        $region19: #{lenet_forward.1} parent=11 // pred_region
          _
        $region20: #{lenet_forward.1} parent=11 // pred_fallthru
          _
        // Predicated region
        $region21: #{lenet_forward.1} parent=11 // pred_check
          %p391 = pneg %p113
        $region22: #{lenet_forward.1} parent=11 // pred_check_branch
          %393 = sbr.rel (%p391) target = $region24
        $region23: #{lenet_forward.1} parent=11 // pred_region
          _
        $region24: #{lenet_forward.1} parent=11 // pred_fallthru
          _
        // Predicated region
        $region25: #{lenet_forward.1} parent=11 // pred_check
          %p394 = pneg %p134
        $region26: #{lenet_forward.1} parent=11 // pred_check_branch
          %396 = sbr.rel (%p394) target = $region28
        $region27: #{lenet_forward.1} parent=11 // pred_region
          _
        $region28: #{lenet_forward.1} parent=11 // pred_fallthru
          _
        // Predicated region
        $region29: #{lenet_forward.1} parent=11 // pred_check
          %p397 = pneg %p155
        $region30: #{lenet_forward.1} parent=11 // pred_check_branch
          %399 = sbr.rel (%p397) target = $region32
        $region31: #{lenet_forward.1} parent=11 // pred_region
          _
        $region32: #{lenet_forward.1} parent=11 // pred_fallthru
          _
        // Predicated region
        $region33: #{lenet_forward.1} parent=11 // pred_check
          %p400 = pneg %p176
        $region34: #{lenet_forward.1} parent=11 // pred_check_branch
          %402 = sbr.rel (%p400) target = $region36
        $region35: #{lenet_forward.1} parent=11 // pred_region
          _
        $region36: #{lenet_forward.1} parent=11 // pred_fallthru
          _
        // Predicated region
        $region37: #{lenet_forward.1} parent=11 // pred_check
          %p403 = pneg %p197
        $region38: #{lenet_forward.1} parent=11 // pred_check_branch
          %405 = sbr.rel (%p403) target = $region40
        $region39: #{lenet_forward.1} parent=11 // pred_region
          _
        $region40: #{lenet_forward.1} parent=11 // pred_fallthru
          _
        // Predicated region
        $region41: #{lenet_forward.1} parent=11 // pred_check
          %p406 = pneg %p218
        $region42: #{lenet_forward.1} parent=11 // pred_check_branch
          %408 = sbr.rel (%p406) target = $region44
        $region43: #{lenet_forward.1} parent=11 // pred_region
          _
        $region44: #{lenet_forward.1} parent=11 // pred_fallthru
          _
        // Predicated region
        $region45: #{lenet_forward.1} parent=11 // pred_check
          %p409 = pneg %p239
        $region46: #{lenet_forward.1} parent=11 // pred_check_branch
          %411 = sbr.rel (%p409) target = $region48
        $region47: #{lenet_forward.1} parent=11 // pred_region
          _
        $region48: #{lenet_forward.1} parent=11 // pred_fallthru
          _
        // Predicated region
        $region49: #{lenet_forward.1} parent=11 // pred_check
          %p412 = pneg %p260
        $region50: #{lenet_forward.1} parent=11 // pred_check_branch
          %414 = sbr.rel (%p412) target = $region52
        $region51: #{lenet_forward.1} parent=11 // pred_region
          _
        $region52: #{lenet_forward.1} parent=11 // pred_fallthru
          _
        // Predicated region
        $region53: #{lenet_forward.1} parent=11 // pred_check
          %p415 = pneg %p281
        $region54: #{lenet_forward.1} parent=11 // pred_check_branch
          %417 = sbr.rel (%p415) target = $region56
        $region55: #{lenet_forward.1} parent=11 // pred_region
          _
        $region56: #{lenet_forward.1} parent=11 // pred_fallthru
          _
        // Predicated region
        $region57: #{lenet_forward.1} parent=11 // pred_check
          %p418 = pneg %p302
        $region58: #{lenet_forward.1} parent=11 // pred_check_branch
          %420 = sbr.rel (%p418) target = $region60
        $region59: #{lenet_forward.1} parent=11 // pred_region
          _
        $region60: #{lenet_forward.1} parent=11 // pred_fallthru
          _
        // Predicated region
        $region61: #{lenet_forward.1} parent=11 // pred_check
          %p421 = pneg %p323
        $region62: #{lenet_forward.1} parent=11 // pred_check_branch
          %423 = sbr.rel (%p421) target = $region64
        $region63: #{lenet_forward.1} parent=11 // pred_region
          _
        $region64: #{lenet_forward.1} parent=11 // pred_fallthru
          _
        // Predicated region
        $region65: #{lenet_forward.1} parent=11 // pred_check
          %p424 = pneg %p344
        $region66: #{lenet_forward.1} parent=11 // pred_check_branch
          %426 = sbr.rel (%p424) target = $region68
        $region67: #{lenet_forward.1} parent=11 // pred_region
          _
        $region68: #{lenet_forward.1} parent=11 // pred_fallthru
          _
      $region12: #{lenet_forward.1} parent=5 // pred_fallthru
        _
      %p427 = scmp.lt.s32.totalorder %s24, 2
      // Predicated region
      $region69: #{lenet_forward.1} parent=5 // pred_check
        %p428 = pneg %p427
      $region70: #{lenet_forward.1} parent=5 // pred_check_branch
        %430 = sbr.rel (%p428) target = $region72
      $region71: #{lenet_forward.1} parent=5 // pred_region
        // Predicated region
        $region73: #{lenet_forward.1} parent=71 // pred_check
          %p431 = pneg %p44
        $region74: #{lenet_forward.1} parent=71 // pred_check_branch
          %433 = sbr.rel (%p431) target = $region76
        $region75: #{lenet_forward.1} parent=71 // pred_region
          %p434 = scmp.lt.s32.totalorder %s24, 1
          %s435 = scalar_select %p434, %s24, 1
          %s436 = smul.addr %s435, 4
          %s437 = smul.addr %s436, 8
          %s438 = scalar_lea.vmem %s0, %s437
        $region76: #{lenet_forward.1} parent=71 // pred_fallthru
          _
      $region72: #{lenet_forward.1} parent=5 // pred_fallthru
        _
      %p439 = scmp.le.s32.totalorder 1, %s24
      %p440 = scmp.lt.s32.totalorder %s24, 3
      %p441 = pnand %p439, %p440
      %p442 = pneg %p441
      // Predicated region
      $region77: #{lenet_forward.1} parent=5 // pred_check
        _
      $region78: #{lenet_forward.1} parent=5 // pred_check_branch
        %444 = sbr.rel (%p441) target = $region80
      $region79: #{lenet_forward.1} parent=5 // pred_region
        %s445 = ssub.s32 %s24, 1
        %p446 = scmp.lt.s32.totalorder %s29, 1
        %s447 = scalar_select %p446, %s29, 1
        %s448 = smul.addr %s447, 4
        %s449 = smul.addr %s448, 8
        %s450 = scalar_lea.vmem %s0, %s449
        %p451 = pneg %p50
        %p452 = pneg %p47
        %p453 = pneg %p71
        %p454 = pneg %p68
        %p455 = pneg %p92
        %p456 = pneg %p89
        %p457 = pneg %p113
        %p458 = pneg %p110
        %p459 = pneg %p134
        %p460 = pneg %p131
        %p461 = pneg %p155
        %p462 = pneg %p152
        %p463 = pneg %p176
        %p464 = pneg %p173
        %p465 = pneg %p197
        %p466 = pneg %p194
        %p467 = pneg %p218
        %p468 = pneg %p215
        %p469 = pneg %p239
        %p470 = pneg %p236
        %p471 = pneg %p260
        %p472 = pneg %p257
        %p473 = pneg %p281
        %p474 = pneg %p278
        %p475 = pneg %p302
        %p476 = pneg %p299
        %p477 = pneg %p323
        %p478 = pneg %p320
        %p479 = pneg %p344
        %p480 = pneg %p341
        %p481 = pneg %p370
        %p482 = pneg %p367
        %s483 = sand.u32 %s357, 1
        %s484 = scalar_lea.sflag [#allocation3], %s483
        %s485 = sand.u32 %s357, 1
        %s486 = scalar_lea.vmem [#allocation2], %s485
        %p487 = scmp.lt.s32.totalorder %s29, 1
        %s488 = scalar_select %p487, %s29, 1
        %s489 = smul.addr %s488, 4
        %s490 = smul.addr %s489, 8
        %s491 = scalar_lea.vmem %s0, %s490
        %v493 = vld [vmem:[%s491] sm:$0xff]
        %v494 = vld [vmem:[%s491 + $0x8] sm:$0xff]
        %v495 = vld [vmem:[%s491 + $0x10] sm:$0xff]
        %v496 = vld [vmem:[%s491 + $0x18] sm:$0xff]
        %v497 = vld [vmem:[%s2] sm:$0x3]
        %v498 = vld [vmem:[%s1] sm:$0xff]
        %v499 = vld [vmem:[%s1 + $0x8] sm:$0xff]
        %v500 = vld [vmem:[%s1 + $0x10] sm:$0xff]
        %v501 = vld [vmem:[%s1 + $0x18] sm:$0xff]
        %v502 = vpack.c.bf16 %v494, %v493
        %v503 = vpack.c.bf16 %v496, %v495
        %v508 = vunpack.c.l.b16 %v498
        %v509 = vunpack.c.h.b16 %v498
        %v510 = vunpack.c.l.b16 %v499
        %v511 = vunpack.c.h.b16 %v499
        %v512 = vunpack.c.l.b16 %v500
        %v513 = vunpack.c.h.b16 %v500
        %v514 = vunpack.c.l.b16 %v501
        %v515 = vunpack.c.h.b16 %v501
        %v516 = vpack.c.b16 %v510, %v508
        %v517 = vpack.c.b16 %v511, %v509
        %v518 = vpack.c.b16 %v514, %v512
        %v519 = vpack.c.b16 %v515, %v513
        %vm524 = vcmask 261120
        %v526 = vsel %vm524, %v502, 0
        %v529 = vsel %vm524, %v503, 0
        %531 = vmatprep.subr.bf16.mxu0 0
        %532 = vmatpush1.bf16.msra.mxu0 0
        %533 = vmatprep.subr.bf16.mxu0 0
        %534 = vmatpush1.bf16.msra.mxu0 0
        %535 = vmatprep.subr.bf16.mxu0 0
        %536 = vmatpush1.bf16.msra.mxu0 0
        %537 = vmatprep.subr.bf16.mxu0 0
        %538 = vmatpush1.bf16.msra.mxu0 0
        %539 = vmatprep.subr.bf16.mxu0 0
        %540 = vmatpush1.bf16.msra.mxu0 0
        %541 = vmatprep.subr.bf16.mxu0 0
        %542 = vmatpush1.bf16.msra.mxu0 0
        %543 = vmatprep.subr.bf16.mxu0 %v519
        %544 = vmatpush1.bf16.msra.mxu0 %v518
        %545 = vmatprep.subr.bf16.mxu0 %v517
        %546 = vmatpush1.bf16.msra.mxu0 %v516
        %547 = vmatprep.subr.bf16.mxu0 0
        %548 = vmatpush2.bf16.msra.mxu0 0
        %549 = vmatprep.subr.bf16.mxu0 0
        %550 = vmatpush2.bf16.msra.mxu0 0
        %551 = vmatprep.subr.bf16.mxu0 0
        %552 = vmatpush2.bf16.msra.mxu0 0
        %553 = vmatprep.subr.bf16.mxu0 0
        %554 = vmatpush2.bf16.msra.mxu0 0
        %555 = vmatprep.subr.bf16.mxu0 0
        %556 = vmatpush2.bf16.msra.mxu0 0
        %557 = vmatprep.subr.bf16.mxu0 0
        %558 = vmatpush2.bf16.msra.mxu0 0
        %559 = vmatprep.subr.bf16.mxu0 0
        %560 = vmatpush2.bf16.msra.mxu0 0
        %561 = vmatprep.subr.bf16.mxu0 0
        %562 = vmatpush2.bf16.msra.mxu0 0
        %563 = vmatprep.mubr.bf16.mxu0 0
        %564 = vmatmul.mubr.bf16.gmra.mxu0 %v526
        %v565 = vpop.f32.mrf.mxu0
        %v566 = vadd.f32 0.0, %v565
        %v567 = vpop.f32.mrf.mxu0
        %v568 = vadd.f32 0.0, %v567
        %v569 = vpop.f32.mrf.mxu0
        %v570 = vadd.f32 0.0, %v569
        %v571 = vpop.f32.mrf.mxu0
        %v572 = vadd.f32 0.0, %v571
        %573 = vmatprep.mubr.bf16.mxu0 0
        %574 = vmatmul.mubr.bf16.gmra.mxu0 %v529
        %v575 = vpop.f32.mrf.mxu0
        %v576 = vadd.f32 0.0, %v575
        %v577 = vpop.f32.mrf.mxu0
        %v578 = vadd.f32 0.0, %v577
        %v579 = vpop.f32.mrf.mxu0
        %v580 = vadd.f32 0.0, %v579
        %v581 = vpop.f32.mrf.mxu0
        %v582 = vadd.f32 0.0, %v581
        %583 = vdwg.mxu0
        %v585 = vlaneseq
        %v586 = vshrl.u32 %v585, 7
        %v587 = vsub.s32 0, %v586
        %v588 = vrot.slane %v497, %v587
        %v589 = vlaneseq
        %v590 = vshrl.u32 %v589, 7
        %v591 = vsub.s32 1, %v590
        %v592 = vrot.slane %v497, %v591
        %v595 = vadd.f32 %v588, %v566
        %v596 = vadd.f32 %v592, %v568
        %v597 = vadd.f32 %v588, %v570
        %v598 = vadd.f32 %v592, %v572
        %v599 = vadd.f32 %v588, %v576
        %v600 = vadd.f32 %v592, %v578
        %v601 = vadd.f32 %v588, %v580
        %v602 = vadd.f32 %v592, %v582
        %s603 = scalar_lea.vmem %s1, 32
        %v604 = vld [vmem:[%s603] sm:$0xff]
        %v605 = vld [vmem:[%s603 + $0x8] sm:$0xff]
        %v606 = vld [vmem:[%s603 + $0x10] sm:$0xff]
        %v607 = vld [vmem:[%s603 + $0x18] sm:$0xff]
        %vm608 = vsmask.f32 7424
        %v609 = vshrl.u32 %v502, 16
        %v611 = vshll.u32 %v502, 16
        %v613 = vrot.slane %v611, 1
        %v614 = vor.u32 %v609, %v613
        %v615 = vshll.u32 %v503, 16
        %v617 = vrot.slane %v615, 1
        %v618 = vsel %vm608, %v614, %v617
        %v619 = vshrl.u32 %v503, 16
        %v621 = vor.u32 %v619, %v617
        %v626 = vunpack.c.l.b16 %v604
        %v627 = vunpack.c.h.b16 %v604
        %v628 = vunpack.c.l.b16 %v605
        %v629 = vunpack.c.h.b16 %v605
        %v630 = vunpack.c.l.b16 %v606
        %v631 = vunpack.c.h.b16 %v606
        %v632 = vunpack.c.l.b16 %v607
        %v633 = vunpack.c.h.b16 %v607
        %v634 = vpack.c.b16 %v628, %v626
        %v635 = vpack.c.b16 %v629, %v627
        %v636 = vpack.c.b16 %v632, %v630
        %v637 = vpack.c.b16 %v633, %v631
        %v643 = vsel %vm524, %v618, 0
        %v646 = vsel %vm524, %v621, 0
        %648 = vmatprep.subr.bf16.mxu0 0
        %649 = vmatpush1.bf16.msra.mxu0 0
        %650 = vmatprep.subr.bf16.mxu0 0
        %651 = vmatpush1.bf16.msra.mxu0 0
        %652 = vmatprep.subr.bf16.mxu0 0
        %653 = vmatpush1.bf16.msra.mxu0 0
        %654 = vmatprep.subr.bf16.mxu0 0
        %655 = vmatpush1.bf16.msra.mxu0 0
        %656 = vmatprep.subr.bf16.mxu0 0
        %657 = vmatpush1.bf16.msra.mxu0 0
        %658 = vmatprep.subr.bf16.mxu0 0
        %659 = vmatpush1.bf16.msra.mxu0 0
        %660 = vmatprep.subr.bf16.mxu0 %v637
        %661 = vmatpush1.bf16.msra.mxu0 %v636
        %662 = vmatprep.subr.bf16.mxu0 %v635
        %663 = vmatpush1.bf16.msra.mxu0 %v634
        %664 = vmatprep.subr.bf16.mxu0 0
        %665 = vmatpush2.bf16.msra.mxu0 0
        %666 = vmatprep.subr.bf16.mxu0 0
        %667 = vmatpush2.bf16.msra.mxu0 0
        %668 = vmatprep.subr.bf16.mxu0 0
        %669 = vmatpush2.bf16.msra.mxu0 0
        %670 = vmatprep.subr.bf16.mxu0 0
        %671 = vmatpush2.bf16.msra.mxu0 0
        %672 = vmatprep.subr.bf16.mxu0 0
        %673 = vmatpush2.bf16.msra.mxu0 0
        %674 = vmatprep.subr.bf16.mxu0 0
        %675 = vmatpush2.bf16.msra.mxu0 0
        %676 = vmatprep.subr.bf16.mxu0 0
        %677 = vmatpush2.bf16.msra.mxu0 0
        %678 = vmatprep.subr.bf16.mxu0 0
        %679 = vmatpush2.bf16.msra.mxu0 0
        %680 = vmatprep.mubr.bf16.mxu0 0
        %681 = vmatmul.mubr.bf16.gmra.mxu0 %v643
        %v682 = vpop.f32.mrf.mxu0
        %v683 = vadd.f32 0.0, %v682
        %v684 = vpop.f32.mrf.mxu0
        %v685 = vadd.f32 0.0, %v684
        %v686 = vpop.f32.mrf.mxu0
        %v687 = vadd.f32 0.0, %v686
        %v688 = vpop.f32.mrf.mxu0
        %v689 = vadd.f32 0.0, %v688
        %690 = vmatprep.mubr.bf16.mxu0 0
        %691 = vmatmul.mubr.bf16.gmra.mxu0 %v646
        %v692 = vpop.f32.mrf.mxu0
        %v693 = vadd.f32 0.0, %v692
        %v694 = vpop.f32.mrf.mxu0
        %v695 = vadd.f32 0.0, %v694
        %v696 = vpop.f32.mrf.mxu0
        %v697 = vadd.f32 0.0, %v696
        %v698 = vpop.f32.mrf.mxu0
        %v699 = vadd.f32 0.0, %v698
        %700 = vdwg.mxu0
        %v701 = vadd.f32 %v595, %v683
        %v702 = vadd.f32 %v596, %v685
        %v703 = vadd.f32 %v597, %v687
        %v704 = vadd.f32 %v598, %v689
        %v705 = vadd.f32 %v599, %v693
        %v706 = vadd.f32 %v600, %v695
        %v707 = vadd.f32 %v601, %v697
        %v708 = vadd.f32 %v602, %v699
        %s709 = scalar_lea.vmem %s1, 64
        %v710 = vld [vmem:[%s709] sm:$0xff]
        %v711 = vld [vmem:[%s709 + $0x8] sm:$0xff]
        %v712 = vld [vmem:[%s709 + $0x10] sm:$0xff]
        %v713 = vld [vmem:[%s709 + $0x18] sm:$0xff]
        %vm716 = vcmask 1046528
        %v717 = vrot.slane %v502, 1
        %v718 = vrot.slane %v503, 1
        %v719 = vsel %vm716, %v717, %v718
        %v724 = vunpack.c.l.b16 %v710
        %v725 = vunpack.c.h.b16 %v710
        %v726 = vunpack.c.l.b16 %v711
        %v727 = vunpack.c.h.b16 %v711
        %v728 = vunpack.c.l.b16 %v712
        %v729 = vunpack.c.h.b16 %v712
        %v730 = vunpack.c.l.b16 %v713
        %v731 = vunpack.c.h.b16 %v713
        %v732 = vpack.c.b16 %v726, %v724
        %v733 = vpack.c.b16 %v727, %v725
        %v734 = vpack.c.b16 %v730, %v728
        %v735 = vpack.c.b16 %v731, %v729
        %v741 = vsel %vm524, %v719, 0
        %v744 = vsel %vm524, %v718, 0
        %746 = vmatprep.subr.bf16.mxu0 0
        %747 = vmatpush1.bf16.msra.mxu0 0
        %748 = vmatprep.subr.bf16.mxu0 0
        %749 = vmatpush1.bf16.msra.mxu0 0
        %750 = vmatprep.subr.bf16.mxu0 0
        %751 = vmatpush1.bf16.msra.mxu0 0
        %752 = vmatprep.subr.bf16.mxu0 0
        %753 = vmatpush1.bf16.msra.mxu0 0
        %754 = vmatprep.subr.bf16.mxu0 0
        %755 = vmatpush1.bf16.msra.mxu0 0
        %756 = vmatprep.subr.bf16.mxu0 0
        %757 = vmatpush1.bf16.msra.mxu0 0
        %758 = vmatprep.subr.bf16.mxu0 %v735
        %759 = vmatpush1.bf16.msra.mxu0 %v734
        %760 = vmatprep.subr.bf16.mxu0 %v733
        %761 = vmatpush1.bf16.msra.mxu0 %v732
        %762 = vmatprep.subr.bf16.mxu0 0
        %763 = vmatpush2.bf16.msra.mxu0 0
        %764 = vmatprep.subr.bf16.mxu0 0
        %765 = vmatpush2.bf16.msra.mxu0 0
        %766 = vmatprep.subr.bf16.mxu0 0
        %767 = vmatpush2.bf16.msra.mxu0 0
        %768 = vmatprep.subr.bf16.mxu0 0
        %769 = vmatpush2.bf16.msra.mxu0 0
        %770 = vmatprep.subr.bf16.mxu0 0
        %771 = vmatpush2.bf16.msra.mxu0 0
        %772 = vmatprep.subr.bf16.mxu0 0
        %773 = vmatpush2.bf16.msra.mxu0 0
        %774 = vmatprep.subr.bf16.mxu0 0
        %775 = vmatpush2.bf16.msra.mxu0 0
        %776 = vmatprep.subr.bf16.mxu0 0
        %777 = vmatpush2.bf16.msra.mxu0 0
        %778 = vmatprep.mubr.bf16.mxu0 0
        %779 = vmatmul.mubr.bf16.gmra.mxu0 %v741
        %v780 = vpop.f32.mrf.mxu0
        %v781 = vadd.f32 0.0, %v780
        %v782 = vpop.f32.mrf.mxu0
        %v783 = vadd.f32 0.0, %v782
        %v784 = vpop.f32.mrf.mxu0
        %v785 = vadd.f32 0.0, %v784
        %v786 = vpop.f32.mrf.mxu0
        %v787 = vadd.f32 0.0, %v786
        %788 = vmatprep.mubr.bf16.mxu0 0
        %789 = vmatmul.mubr.bf16.gmra.mxu0 %v744
        %v790 = vpop.f32.mrf.mxu0
        %v791 = vadd.f32 0.0, %v790
        %v792 = vpop.f32.mrf.mxu0
        %v793 = vadd.f32 0.0, %v792
        %v794 = vpop.f32.mrf.mxu0
        %v795 = vadd.f32 0.0, %v794
        %v796 = vpop.f32.mrf.mxu0
        %v797 = vadd.f32 0.0, %v796
        %798 = vdwg.mxu0
        %v799 = vadd.f32 %v701, %v781
        %v800 = vadd.f32 %v702, %v783
        %v801 = vadd.f32 %v703, %v785
        %v802 = vadd.f32 %v704, %v787
        %v803 = vadd.f32 %v705, %v791
        %v804 = vadd.f32 %v706, %v793
        %v805 = vadd.f32 %v707, %v795
        %v806 = vadd.f32 %v708, %v797
        %s807 = scalar_lea.vmem %s1, 96
        %v808 = vld [vmem:[%s807] sm:$0xff]
        %v809 = vld [vmem:[%s807 + $0x8] sm:$0xff]
        %v810 = vld [vmem:[%s807 + $0x10] sm:$0xff]
        %v811 = vld [vmem:[%s807 + $0x18] sm:$0xff]
        %vm812 = vsmask.f32 6400
        %v813 = vrot.slane %v609, 1
        %v814 = vrot.slane %v611, 2
        %v815 = vor.u32 %v813, %v814
        %v816 = vrot.slane %v619, 1
        %v817 = vrot.slane %v615, 2
        %v818 = vor.u32 %v816, %v817
        %v819 = vsel %vm812, %v815, %v818
        %v824 = vunpack.c.l.b16 %v808
        %v825 = vunpack.c.h.b16 %v808
        %v826 = vunpack.c.l.b16 %v809
        %v827 = vunpack.c.h.b16 %v809
        %v828 = vunpack.c.l.b16 %v810
        %v829 = vunpack.c.h.b16 %v810
        %v830 = vunpack.c.l.b16 %v811
        %v831 = vunpack.c.h.b16 %v811
        %v832 = vpack.c.b16 %v826, %v824
        %v833 = vpack.c.b16 %v827, %v825
        %v834 = vpack.c.b16 %v830, %v828
        %v835 = vpack.c.b16 %v831, %v829
        %v841 = vsel %vm524, %v819, 0
        %v844 = vsel %vm524, %v818, 0
        %846 = vmatprep.subr.bf16.mxu0 0
        %847 = vmatpush1.bf16.msra.mxu0 0
        %848 = vmatprep.subr.bf16.mxu0 0
        %849 = vmatpush1.bf16.msra.mxu0 0
        %850 = vmatprep.subr.bf16.mxu0 0
        %851 = vmatpush1.bf16.msra.mxu0 0
        %852 = vmatprep.subr.bf16.mxu0 0
        %853 = vmatpush1.bf16.msra.mxu0 0
        %854 = vmatprep.subr.bf16.mxu0 0
        %855 = vmatpush1.bf16.msra.mxu0 0
        %856 = vmatprep.subr.bf16.mxu0 0
        %857 = vmatpush1.bf16.msra.mxu0 0
        %858 = vmatprep.subr.bf16.mxu0 %v835
        %859 = vmatpush1.bf16.msra.mxu0 %v834
        %860 = vmatprep.subr.bf16.mxu0 %v833
        %861 = vmatpush1.bf16.msra.mxu0 %v832
        %862 = vmatprep.subr.bf16.mxu0 0
        %863 = vmatpush2.bf16.msra.mxu0 0
        %864 = vmatprep.subr.bf16.mxu0 0
        %865 = vmatpush2.bf16.msra.mxu0 0
        %866 = vmatprep.subr.bf16.mxu0 0
        %867 = vmatpush2.bf16.msra.mxu0 0
        %868 = vmatprep.subr.bf16.mxu0 0
        %869 = vmatpush2.bf16.msra.mxu0 0
        %870 = vmatprep.subr.bf16.mxu0 0
        %871 = vmatpush2.bf16.msra.mxu0 0
        %872 = vmatprep.subr.bf16.mxu0 0
        %873 = vmatpush2.bf16.msra.mxu0 0
        %874 = vmatprep.subr.bf16.mxu0 0
        %875 = vmatpush2.bf16.msra.mxu0 0
        %876 = vmatprep.subr.bf16.mxu0 0
        %877 = vmatpush2.bf16.msra.mxu0 0
        %878 = vmatprep.mubr.bf16.mxu0 0
        %879 = vmatmul.mubr.bf16.gmra.mxu0 %v841
        %v880 = vpop.f32.mrf.mxu0
        %v881 = vadd.f32 0.0, %v880
        %v882 = vpop.f32.mrf.mxu0
        %v883 = vadd.f32 0.0, %v882
        %v884 = vpop.f32.mrf.mxu0
        %v885 = vadd.f32 0.0, %v884
        %v886 = vpop.f32.mrf.mxu0
        %v887 = vadd.f32 0.0, %v886
        %888 = vmatprep.mubr.bf16.mxu0 0
        %889 = vmatmul.mubr.bf16.gmra.mxu0 %v844
        %v890 = vpop.f32.mrf.mxu0
        %v891 = vadd.f32 0.0, %v890
        %v892 = vpop.f32.mrf.mxu0
        %v893 = vadd.f32 0.0, %v892
        %v894 = vpop.f32.mrf.mxu0
        %v895 = vadd.f32 0.0, %v894
        %v896 = vpop.f32.mrf.mxu0
        %v897 = vadd.f32 0.0, %v896
        %898 = vdwg.mxu0
        %v899 = vadd.f32 %v799, %v881
        %v900 = vadd.f32 %v800, %v883
        %v901 = vadd.f32 %v801, %v885
        %v902 = vadd.f32 %v802, %v887
        %v903 = vadd.f32 %v803, %v891
        %v904 = vadd.f32 %v804, %v893
        %v905 = vadd.f32 %v805, %v895
        %v906 = vadd.f32 %v806, %v897
        %s907 = scalar_lea.vmem %s1, 128
        %v908 = vld [vmem:[%s907] sm:$0xff]
        %v909 = vld [vmem:[%s907 + $0x8] sm:$0xff]
        %v910 = vld [vmem:[%s907 + $0x10] sm:$0xff]
        %v911 = vld [vmem:[%s907 + $0x18] sm:$0xff]
        %vm912 = vcmask 1045504
        %v913 = vrot.slane %v502, 2
        %v914 = vrot.slane %v503, 2
        %v915 = vsel %vm912, %v913, %v914
        %v920 = vunpack.c.l.b16 %v908
        %v921 = vunpack.c.h.b16 %v908
        %v922 = vunpack.c.l.b16 %v909
        %v923 = vunpack.c.h.b16 %v909
        %v924 = vunpack.c.l.b16 %v910
        %v925 = vunpack.c.h.b16 %v910
        %v926 = vunpack.c.l.b16 %v911
        %v927 = vunpack.c.h.b16 %v911
        %v928 = vpack.c.b16 %v922, %v920
        %v929 = vpack.c.b16 %v923, %v921
        %v930 = vpack.c.b16 %v926, %v924
        %v931 = vpack.c.b16 %v927, %v925
        %v937 = vsel %vm524, %v915, 0
        %v940 = vsel %vm524, %v914, 0
        %942 = vmatprep.subr.bf16.mxu0 0
        %943 = vmatpush1.bf16.msra.mxu0 0
        %944 = vmatprep.subr.bf16.mxu0 0
        %945 = vmatpush1.bf16.msra.mxu0 0
        %946 = vmatprep.subr.bf16.mxu0 0
        %947 = vmatpush1.bf16.msra.mxu0 0
        %948 = vmatprep.subr.bf16.mxu0 0
        %949 = vmatpush1.bf16.msra.mxu0 0
        %950 = vmatprep.subr.bf16.mxu0 0
        %951 = vmatpush1.bf16.msra.mxu0 0
        %952 = vmatprep.subr.bf16.mxu0 0
        %953 = vmatpush1.bf16.msra.mxu0 0
        %954 = vmatprep.subr.bf16.mxu0 %v931
        %955 = vmatpush1.bf16.msra.mxu0 %v930
        %956 = vmatprep.subr.bf16.mxu0 %v929
        %957 = vmatpush1.bf16.msra.mxu0 %v928
        %958 = vmatprep.subr.bf16.mxu0 0
        %959 = vmatpush2.bf16.msra.mxu0 0
        %960 = vmatprep.subr.bf16.mxu0 0
        %961 = vmatpush2.bf16.msra.mxu0 0
        %962 = vmatprep.subr.bf16.mxu0 0
        %963 = vmatpush2.bf16.msra.mxu0 0
        %964 = vmatprep.subr.bf16.mxu0 0
        %965 = vmatpush2.bf16.msra.mxu0 0
        %966 = vmatprep.subr.bf16.mxu0 0
        %967 = vmatpush2.bf16.msra.mxu0 0
        %968 = vmatprep.subr.bf16.mxu0 0
        %969 = vmatpush2.bf16.msra.mxu0 0
        %970 = vmatprep.subr.bf16.mxu0 0
        %971 = vmatpush2.bf16.msra.mxu0 0
        %972 = vmatprep.subr.bf16.mxu0 0
        %973 = vmatpush2.bf16.msra.mxu0 0
        %974 = vmatprep.mubr.bf16.mxu0 0
        %975 = vmatmul.mubr.bf16.gmra.mxu0 %v937
        %v976 = vpop.f32.mrf.mxu0
        %v977 = vadd.f32 0.0, %v976
        %v978 = vpop.f32.mrf.mxu0
        %v979 = vadd.f32 0.0, %v978
        %v980 = vpop.f32.mrf.mxu0
        %v981 = vadd.f32 0.0, %v980
        %v982 = vpop.f32.mrf.mxu0
        %v983 = vadd.f32 0.0, %v982
        %984 = vmatprep.mubr.bf16.mxu0 0
        %985 = vmatmul.mubr.bf16.gmra.mxu0 %v940
        %v986 = vpop.f32.mrf.mxu0
        %v987 = vadd.f32 0.0, %v986
        %v988 = vpop.f32.mrf.mxu0
        %v989 = vadd.f32 0.0, %v988
        %v990 = vpop.f32.mrf.mxu0
        %v991 = vadd.f32 0.0, %v990
        %v992 = vpop.f32.mrf.mxu0
        %v993 = vadd.f32 0.0, %v992
        %994 = vdwg.mxu0
        %v995 = vadd.f32 %v899, %v977
        %v996 = vadd.f32 %v900, %v979
        %v997 = vadd.f32 %v901, %v981
        %v998 = vadd.f32 %v902, %v983
        %v999 = vadd.f32 %v903, %v987
        %v1000 = vadd.f32 %v904, %v989
        %v1001 = vadd.f32 %v905, %v991
        %v1002 = vadd.f32 %v906, %v993
        %v1003 = vmax.f32 %v995, 0.0
        %v1004 = vmax.f32 %v996, 0.0
        %v1005 = vmax.f32 %v997, 0.0
        %v1006 = vmax.f32 %v998, 0.0
        %v1007 = vmax.f32 %v999, 0.0
        %v1008 = vmax.f32 %v1000, 0.0
        %v1009 = vmax.f32 %v1001, 0.0
        %v1010 = vmax.f32 %v1002, 0.0
        %v1011 = vld [vmem:[%s3] sm:$0xf]
        %v1012 = vld [vmem:[%s3 + $0x4] sm:$0x7]
        %v1013 = vpack.c.bf16 %v1005, %v1003
        %v1014 = vpack.c.bf16 %v1006, %v1004
        %v1015 = vpack.c.bf16 %v1009, %v1007
        %v1016 = vpack.c.bf16 %v1010, %v1008
        %v1019 = vunpack.c.l.b16 %v1011
        %v1020 = vunpack.c.l.b16 %v1012
        %v1021 = vpack.c.b16 %v1020, %v1019
        %vm1022 = vcmask 228352
        %v1024 = vsel %vm1022, %v1021, 0
        %vm1026 = vcmask 1045504
        %v1028 = vsel %vm1026, %v1015, 0
        %v1031 = vsel %vm1026, %v1016, 0
        %1033 = vmatprep.subr.bf16.mxu0 0
        %1034 = vmatpush1.bf16.msra.mxu0 0
        %1035 = vmatprep.subr.bf16.mxu0 0
        %1036 = vmatpush1.bf16.msra.mxu0 0
        %1037 = vmatprep.subr.bf16.mxu0 0
        %1038 = vmatpush1.bf16.msra.mxu0 0
        %1039 = vmatprep.subr.bf16.mxu0 0
        %1040 = vmatpush1.bf16.msra.mxu0 0
        %1041 = vmatprep.subr.bf16.mxu0 0
        %1042 = vmatpush1.bf16.msra.mxu0 0
        %1043 = vmatprep.subr.bf16.mxu0 0
        %1044 = vmatpush1.bf16.msra.mxu0 0
        %1045 = vmatprep.subr.bf16.mxu0 %v1031
        %1046 = vmatpush1.bf16.msra.mxu0 %v1028
        %1047 = vmatprep.subr.bf16.mxu0 %v1014
        %1048 = vmatpush1.bf16.msra.mxu0 %v1013
        %1049 = vmatprep.subr.bf16.mxu0 0
        %1050 = vmatpush2.bf16.msra.mxu0 0
        %1051 = vmatprep.subr.bf16.mxu0 0
        %1052 = vmatpush2.bf16.msra.mxu0 0
        %1053 = vmatprep.subr.bf16.mxu0 0
        %1054 = vmatpush2.bf16.msra.mxu0 0
        %1055 = vmatprep.subr.bf16.mxu0 0
        %1056 = vmatpush2.bf16.msra.mxu0 0
        %1057 = vmatprep.subr.bf16.mxu0 0
        %1058 = vmatpush2.bf16.msra.mxu0 0
        %1059 = vmatprep.subr.bf16.mxu0 0
        %1060 = vmatpush2.bf16.msra.mxu0 0
        %1061 = vmatprep.subr.bf16.mxu0 0
        %1062 = vmatpush2.bf16.msra.mxu0 0
        %1063 = vmatprep.subr.bf16.mxu0 0
        %1064 = vmatpush2.bf16.msra.mxu0 0
        %1065 = vmatprep.mubr.bf16.mxu0 0
        %1066 = vmatmul.mubr.bf16.gmra.mxu0 %v1024
        %v1067 = vpop.f32.mrf.mxu0
        %v1068 = vadd.f32 0.0, %v1067
        %v1069 = vpop.f32.mrf.mxu0
        %v1070 = vadd.f32 0.0, %v1069
        %v1071 = vpop.f32.mrf.mxu0
        %v1072 = vadd.f32 0.0, %v1071
        %v1073 = vpop.f32.mrf.mxu0
        %v1074 = vadd.f32 0.0, %v1073
        %1075 = vdwg.mxu0
        %v1076 = vld [vmem:[%s4] sm:$0xf]
        %v1077 = vld [vmem:[%s4 + $0x4] sm:$0xf]
        %v1078 = vld [vmem:[%s4 + $0x8] sm:$0xf]
        %v1079 = vld [vmem:[%s4 + $0xc] sm:$0xf]
        %v1080 = vld [vmem:[%s4 + $0x10] sm:$0xf]
        %v1081 = vld [vmem:[%s4 + $0x14] sm:$0xf]
        %v1082 = vld [vmem:[%s4 + $0x18] sm:$0xf]
        %v1083 = vld [vmem:[%s4 + $0x1c] sm:$0xf]
        %v1084 = vld [vmem:[%s4 + $0x20] sm:$0xf]
        %v1085 = vld [vmem:[%s4 + $0x24] sm:$0xf]
        %v1086 = vld [vmem:[%s4 + $0x28] sm:$0xf]
        %v1087 = vld [vmem:[%s4 + $0x2c] sm:$0xf]
        %v1088 = vld [vmem:[%s4 + $0x30] sm:$0xf]
        %v1089 = vld [vmem:[%s4 + $0x34] sm:$0xf]
        %v1090 = vld [vmem:[%s4 + $0x38] sm:$0xf]
        %v1091 = vld [vmem:[%s4 + $0x3c] sm:$0xf]
        %v1092 = vld [vmem:[%s4 + $0x40] sm:$0xf]
        %v1093 = vld [vmem:[%s4 + $0x44] sm:$0xf]
        %v1094 = vld [vmem:[%s4 + $0x48] sm:$0xf]
        %v1095 = vld [vmem:[%s4 + $0x4c] sm:$0xf]
        %v1096 = vld [vmem:[%s4 + $0x50] sm:$0xf]
        %v1097 = vpack.c.bf16 %v1072, %v1068
        %v1098 = vpack.c.bf16 %v1074, %v1070
        %v1120 = vunpack.c.l.b16 %v1076
        %v1121 = vunpack.c.l.b16 %v1077
        %v1122 = vunpack.c.l.b16 %v1078
        %v1123 = vunpack.c.l.b16 %v1079
        %v1124 = vunpack.c.l.b16 %v1080
        %v1125 = vunpack.c.l.b16 %v1081
        %v1126 = vunpack.c.l.b16 %v1082
        %v1127 = vunpack.c.l.b16 %v1083
        %v1128 = vunpack.c.l.b16 %v1084
        %v1129 = vunpack.c.l.b16 %v1085
        %v1130 = vunpack.c.l.b16 %v1086
        %v1131 = vunpack.c.l.b16 %v1087
        %v1132 = vunpack.c.l.b16 %v1088
        %v1133 = vunpack.c.l.b16 %v1089
        %v1134 = vunpack.c.l.b16 %v1090
        %v1135 = vunpack.c.l.b16 %v1091
        %v1136 = vunpack.c.l.b16 %v1092
        %v1137 = vunpack.c.l.b16 %v1093
        %v1138 = vunpack.c.l.b16 %v1094
        %v1139 = vunpack.c.l.b16 %v1095
        %v1140 = vunpack.c.l.b16 %v1096
        %v1141 = vpack.c.b16 %v1121, %v1120
        %v1142 = vpack.c.b16 %v1123, %v1122
        %v1143 = vpack.c.b16 %v1125, %v1124
        %v1144 = vpack.c.b16 %v1127, %v1126
        %v1145 = vpack.c.b16 %v1129, %v1128
        %v1146 = vpack.c.b16 %v1131, %v1130
        %v1147 = vpack.c.b16 %v1133, %v1132
        %v1148 = vpack.c.b16 %v1135, %v1134
        %v1149 = vpack.c.b16 %v1137, %v1136
        %v1150 = vpack.c.b16 %v1139, %v1138
        %v1151 = vpack.c.b16 %v1140, %v1140
        %vm1162 = vcmask 326656
        %v1164 = vsel %vm1162, %v1098, 0
        %vm1166 = vcmask 1043456
        %v1168 = vsel %vm1166, %v1151, 0
        %1170 = vmatprep.subr.bf16.mxu0 0
        %1171 = vmatpush1.bf16.msra.mxu0 %v1148
        %1172 = vmatprep.subr.bf16.mxu0 0
        %1173 = vmatpush1.bf16.msra.mxu0 %v1147
        %1174 = vmatprep.subr.bf16.mxu0 0
        %1175 = vmatpush1.bf16.msra.mxu0 %v1146
        %1176 = vmatprep.subr.bf16.mxu0 0
        %1177 = vmatpush1.bf16.msra.mxu0 %v1145
        %1178 = vmatprep.subr.bf16.mxu0 0
        %1179 = vmatpush1.bf16.msra.mxu0 %v1144
        %1180 = vmatprep.subr.bf16.mxu0 0
        %1181 = vmatpush1.bf16.msra.mxu0 %v1143
        %1182 = vmatprep.subr.bf16.mxu0 0
        %1183 = vmatpush1.bf16.msra.mxu0 %v1142
        %1184 = vmatprep.subr.bf16.mxu0 0
        %1185 = vmatpush1.bf16.msra.mxu0 %v1141
        %1186 = vmatprep.subr.bf16.mxu0 0
        %1187 = vmatpush2.bf16.msra.mxu0 0
        %1188 = vmatprep.subr.bf16.mxu0 0
        %1189 = vmatpush2.bf16.msra.mxu0 0
        %1190 = vmatprep.subr.bf16.mxu0 0
        %1191 = vmatpush2.bf16.msra.mxu0 0
        %1192 = vmatprep.subr.bf16.mxu0 0
        %1193 = vmatpush2.bf16.msra.mxu0 0
        %1194 = vmatprep.subr.bf16.mxu0 0
        %1195 = vmatpush2.bf16.msra.mxu0 0
        %1196 = vmatprep.subr.bf16.mxu0 0
        %1197 = vmatpush2.bf16.msra.mxu0 %v1168
        %1198 = vmatprep.subr.bf16.mxu0 0
        %1199 = vmatpush2.bf16.msra.mxu0 %v1150
        %1200 = vmatprep.subr.bf16.mxu0 0
        %1201 = vmatpush2.bf16.msra.mxu0 %v1149
        %1202 = vmatprep.mubr.bf16.mxu0 %v1164
        %1203 = vmatmul.mubr.bf16.gmra.mxu0 %v1097
        %v1204 = vpop.f32.mrf.mxu0
        %v1205 = vadd.f32 0.0, %v1204
        %v1206 = vpop.f32.mrf.mxu0
        %v1207 = vpop.f32.mrf.mxu0
        %v1208 = vadd.f32 0.0, %v1207
        %v1209 = vpop.f32.mrf.mxu0
        %1210 = vdwg.mxu0
        %v1211 = vld [vmem:[%s6] sm:$0x3]
        %v1212 = vld [vmem:[%s5] sm:$0xff]
        %v1213 = vld [vmem:[%s5 + $0x8] sm:$0xff]
        %v1214 = vld [vmem:[%s5 + $0x10] sm:$0xff]
        %v1215 = vld [vmem:[%s5 + $0x18] sm:$0xff]
        %v1216 = vld [vmem:[%s5 + $0x20] sm:$0xff]
        %v1217 = vld [vmem:[%s5 + $0x28] sm:$0xff]
        %v1218 = vld [vmem:[%s5 + $0x30] sm:$0xff]
        %v1219 = vld [vmem:[%s5 + $0x38] sm:$0xff]
        %v1220 = vld [vmem:[%s5 + $0x40] sm:$0xff]
        %v1221 = vld [vmem:[%s5 + $0x48] sm:$0xff]
        %v1222 = vld [vmem:[%s5 + $0x50] sm:$0x33]
        %v1223 = vpack.c.bf16 %v1208, %v1205
        %v1235 = vunpack.c.l.b16 %v1212
        %v1236 = vunpack.c.h.b16 %v1212
        %v1237 = vunpack.c.l.b16 %v1213
        %v1238 = vunpack.c.h.b16 %v1213
        %v1239 = vunpack.c.l.b16 %v1214
        %v1240 = vunpack.c.h.b16 %v1214
        %v1241 = vunpack.c.l.b16 %v1215
        %v1242 = vunpack.c.h.b16 %v1215
        %v1243 = vunpack.c.l.b16 %v1216
        %v1244 = vunpack.c.h.b16 %v1216
        %v1245 = vunpack.c.l.b16 %v1217
        %v1246 = vunpack.c.h.b16 %v1217
        %v1247 = vunpack.c.l.b16 %v1218
        %v1248 = vunpack.c.h.b16 %v1218
        %v1249 = vunpack.c.l.b16 %v1219
        %v1250 = vunpack.c.h.b16 %v1219
        %v1251 = vunpack.c.l.b16 %v1220
        %v1252 = vunpack.c.h.b16 %v1220
        %v1253 = vunpack.c.l.b16 %v1221
        %v1254 = vunpack.c.h.b16 %v1221
        %v1255 = vunpack.c.l.b16 %v1222
        %v1256 = vunpack.c.h.b16 %v1222
        %v1257 = vpack.c.b16 %v1237, %v1235
        %v1258 = vpack.c.b16 %v1238, %v1236
        %v1259 = vpack.c.b16 %v1241, %v1239
        %v1260 = vpack.c.b16 %v1242, %v1240
        %v1261 = vpack.c.b16 %v1245, %v1243
        %v1262 = vpack.c.b16 %v1246, %v1244
        %v1263 = vpack.c.b16 %v1249, %v1247
        %v1264 = vpack.c.b16 %v1250, %v1248
        %v1265 = vpack.c.b16 %v1253, %v1251
        %v1266 = vpack.c.b16 %v1254, %v1252
        %v1267 = vpack.c.b16 %v1255, %v1255
        %v1268 = vpack.c.b16 %v1256, %v1256
        %vm1279 = vcmask 687104
        %v1281 = vsel %vm1279, %v1223, 0
        %vm1283 = vcmask 1041408
        %v1285 = vsel %vm1283, %v1267, 0
        %v1288 = vsel %vm1283, %v1268, 0
        %1290 = vmatprep.subr.bf16.mxu0 0
        %1291 = vmatpush1.bf16.msra.mxu0 0
        %1292 = vmatprep.subr.bf16.mxu0 0
        %1293 = vmatpush1.bf16.msra.mxu0 0
        %1294 = vmatprep.subr.bf16.mxu0 %v1288
        %1295 = vmatpush1.bf16.msra.mxu0 %v1285
        %1296 = vmatprep.subr.bf16.mxu0 %v1266
        %1297 = vmatpush1.bf16.msra.mxu0 %v1265
        %1298 = vmatprep.subr.bf16.mxu0 %v1264
        %1299 = vmatpush1.bf16.msra.mxu0 %v1263
        %1300 = vmatprep.subr.bf16.mxu0 %v1262
        %1301 = vmatpush1.bf16.msra.mxu0 %v1261
        %1302 = vmatprep.subr.bf16.mxu0 %v1260
        %1303 = vmatpush1.bf16.msra.mxu0 %v1259
        %1304 = vmatprep.subr.bf16.mxu0 %v1258
        %1305 = vmatpush1.bf16.msra.mxu0 %v1257
        %1306 = vmatprep.subr.bf16.mxu0 0
        %1307 = vmatpush2.bf16.msra.mxu0 0
        %1308 = vmatprep.subr.bf16.mxu0 0
        %1309 = vmatpush2.bf16.msra.mxu0 0
        %1310 = vmatprep.subr.bf16.mxu0 0
        %1311 = vmatpush2.bf16.msra.mxu0 0
        %1312 = vmatprep.subr.bf16.mxu0 0
        %1313 = vmatpush2.bf16.msra.mxu0 0
        %1314 = vmatprep.subr.bf16.mxu0 0
        %1315 = vmatpush2.bf16.msra.mxu0 0
        %1316 = vmatprep.subr.bf16.mxu0 0
        %1317 = vmatpush2.bf16.msra.mxu0 0
        %1318 = vmatprep.subr.bf16.mxu0 0
        %1319 = vmatpush2.bf16.msra.mxu0 0
        %1320 = vmatprep.subr.bf16.mxu0 0
        %1321 = vmatpush2.bf16.msra.mxu0 0
        %1322 = vmatprep.mubr.bf16.mxu0 0
        %1323 = vmatmul.mubr.bf16.gmra.mxu0 %v1281
        %v1324 = vpop.f32.mrf.mxu0
        %v1325 = vadd.f32 0.0, %v1324
        %v1326 = vpop.f32.mrf.mxu0
        %v1327 = vadd.f32 0.0, %v1326
        %v1328 = vpop.f32.mrf.mxu0
        %v1329 = vadd.f32 0.0, %v1328
        %v1330 = vpop.f32.mrf.mxu0
        %v1331 = vadd.f32 0.0, %v1330
        %1332 = vdwg.mxu0
        %v1334 = vlaneseq
        %v1335 = vshrl.u32 %v1334, 7
        %v1336 = vsub.s32 0, %v1335
        %v1337 = vrot.slane %v1211, %v1336
        %v1338 = vlaneseq
        %v1339 = vshrl.u32 %v1338, 7
        %v1340 = vsub.s32 1, %v1339
        %v1341 = vrot.slane %v1211, %v1340
        %v1344 = vadd.f32 %v1337, %v1325
        %v1345 = vadd.f32 %v1341, %v1327
        %v1346 = vadd.f32 %v1337, %v1329
        %v1347 = vadd.f32 %v1341, %v1331
        %s1348 = scalar_lea.vmem %s5, 88
        %v1349 = vld [vmem:[%s1348] sm:$0xff]
        %v1350 = vld [vmem:[%s1348 + $0x8] sm:$0xff]
        %v1351 = vld [vmem:[%s1348 + $0x10] sm:$0xff]
        %v1352 = vld [vmem:[%s1348 + $0x18] sm:$0xff]
        %v1353 = vld [vmem:[%s1348 + $0x20] sm:$0xff]
        %v1354 = vld [vmem:[%s1348 + $0x28] sm:$0xff]
        %v1355 = vld [vmem:[%s1348 + $0x30] sm:$0xff]
        %v1356 = vld [vmem:[%s1348 + $0x38] sm:$0xff]
        %v1357 = vld [vmem:[%s1348 + $0x40] sm:$0xff]
        %v1358 = vld [vmem:[%s1348 + $0x48] sm:$0xff]
        %v1359 = vld [vmem:[%s1348 + $0x50] sm:$0x33]
        %v1360 = vshrl.u32 %v1223, 16
        %v1362 = vshll.u32 %v1223, 16
        %v1364 = vrot.slane %v1362, 1
        %v1365 = vor.u32 %v1360, %v1364
        %v1377 = vunpack.c.l.b16 %v1349
        %v1378 = vunpack.c.h.b16 %v1349
        %v1379 = vunpack.c.l.b16 %v1350
        %v1380 = vunpack.c.h.b16 %v1350
        %v1381 = vunpack.c.l.b16 %v1351
        %v1382 = vunpack.c.h.b16 %v1351
        %v1383 = vunpack.c.l.b16 %v1352
        %v1384 = vunpack.c.h.b16 %v1352
        %v1385 = vunpack.c.l.b16 %v1353
        %v1386 = vunpack.c.h.b16 %v1353
        %v1387 = vunpack.c.l.b16 %v1354
        %v1388 = vunpack.c.h.b16 %v1354
        %v1389 = vunpack.c.l.b16 %v1355
        %v1390 = vunpack.c.h.b16 %v1355
        %v1391 = vunpack.c.l.b16 %v1356
        %v1392 = vunpack.c.h.b16 %v1356
        %v1393 = vunpack.c.l.b16 %v1357
        %v1394 = vunpack.c.h.b16 %v1357
        %v1395 = vunpack.c.l.b16 %v1358
        %v1396 = vunpack.c.h.b16 %v1358
        %v1397 = vunpack.c.l.b16 %v1359
        %v1398 = vunpack.c.h.b16 %v1359
        %v1399 = vpack.c.b16 %v1379, %v1377
        %v1400 = vpack.c.b16 %v1380, %v1378
        %v1401 = vpack.c.b16 %v1383, %v1381
        %v1402 = vpack.c.b16 %v1384, %v1382
        %v1403 = vpack.c.b16 %v1387, %v1385
        %v1404 = vpack.c.b16 %v1388, %v1386
        %v1405 = vpack.c.b16 %v1391, %v1389
        %v1406 = vpack.c.b16 %v1392, %v1390
        %v1407 = vpack.c.b16 %v1395, %v1393
        %v1408 = vpack.c.b16 %v1396, %v1394
        %v1409 = vpack.c.b16 %v1397, %v1397
        %v1410 = vpack.c.b16 %v1398, %v1398
        %v1422 = vsel %vm1279, %v1365, 0
        %v1425 = vsel %vm1283, %v1409, 0
        %v1428 = vsel %vm1283, %v1410, 0
        %1430 = vmatprep.subr.bf16.mxu0 0
        %1431 = vmatpush1.bf16.msra.mxu0 0
        %1432 = vmatprep.subr.bf16.mxu0 0
        %1433 = vmatpush1.bf16.msra.mxu0 0
        %1434 = vmatprep.subr.bf16.mxu0 %v1428
        %1435 = vmatpush1.bf16.msra.mxu0 %v1425
        %1436 = vmatprep.subr.bf16.mxu0 %v1408
        %1437 = vmatpush1.bf16.msra.mxu0 %v1407
        %1438 = vmatprep.subr.bf16.mxu0 %v1406
        %1439 = vmatpush1.bf16.msra.mxu0 %v1405
        %1440 = vmatprep.subr.bf16.mxu0 %v1404
        %1441 = vmatpush1.bf16.msra.mxu0 %v1403
        %1442 = vmatprep.subr.bf16.mxu0 %v1402
        %1443 = vmatpush1.bf16.msra.mxu0 %v1401
        %1444 = vmatprep.subr.bf16.mxu0 %v1400
        %1445 = vmatpush1.bf16.msra.mxu0 %v1399
        %1446 = vmatprep.subr.bf16.mxu0 0
        %1447 = vmatpush2.bf16.msra.mxu0 0
        %1448 = vmatprep.subr.bf16.mxu0 0
        %1449 = vmatpush2.bf16.msra.mxu0 0
        %1450 = vmatprep.subr.bf16.mxu0 0
        %1451 = vmatpush2.bf16.msra.mxu0 0
        %1452 = vmatprep.subr.bf16.mxu0 0
        %1453 = vmatpush2.bf16.msra.mxu0 0
        %1454 = vmatprep.subr.bf16.mxu0 0
        %1455 = vmatpush2.bf16.msra.mxu0 0
        %1456 = vmatprep.subr.bf16.mxu0 0
        %1457 = vmatpush2.bf16.msra.mxu0 0
        %1458 = vmatprep.subr.bf16.mxu0 0
        %1459 = vmatpush2.bf16.msra.mxu0 0
        %1460 = vmatprep.subr.bf16.mxu0 0
        %1461 = vmatpush2.bf16.msra.mxu0 0
        %1462 = vmatprep.mubr.bf16.mxu0 0
        %1463 = vmatmul.mubr.bf16.gmra.mxu0 %v1422
        %v1464 = vpop.f32.mrf.mxu0
        %v1465 = vadd.f32 0.0, %v1464
        %v1466 = vpop.f32.mrf.mxu0
        %v1467 = vadd.f32 0.0, %v1466
        %v1468 = vpop.f32.mrf.mxu0
        %v1469 = vadd.f32 0.0, %v1468
        %v1470 = vpop.f32.mrf.mxu0
        %v1471 = vadd.f32 0.0, %v1470
        %1472 = vdwg.mxu0
        %v1473 = vadd.f32 %v1344, %v1465
        %v1474 = vadd.f32 %v1345, %v1467
        %v1475 = vadd.f32 %v1346, %v1469
        %v1476 = vadd.f32 %v1347, %v1471
        %s1477 = scalar_lea.vmem %s5, 176
        %v1478 = vld [vmem:[%s1477] sm:$0xff]
        %v1479 = vld [vmem:[%s1477 + $0x8] sm:$0xff]
        %v1480 = vld [vmem:[%s1477 + $0x10] sm:$0xff]
        %v1481 = vld [vmem:[%s1477 + $0x18] sm:$0xff]
        %v1482 = vld [vmem:[%s1477 + $0x20] sm:$0xff]
        %v1483 = vld [vmem:[%s1477 + $0x28] sm:$0xff]
        %v1484 = vld [vmem:[%s1477 + $0x30] sm:$0xff]
        %v1485 = vld [vmem:[%s1477 + $0x38] sm:$0xff]
        %v1486 = vld [vmem:[%s1477 + $0x40] sm:$0xff]
        %v1487 = vld [vmem:[%s1477 + $0x48] sm:$0xff]
        %v1488 = vld [vmem:[%s1477 + $0x50] sm:$0x33]
        %v1490 = vrot.slane %v1223, 1
        %v1502 = vunpack.c.l.b16 %v1478
        %v1503 = vunpack.c.h.b16 %v1478
        %v1504 = vunpack.c.l.b16 %v1479
        %v1505 = vunpack.c.h.b16 %v1479
        %v1506 = vunpack.c.l.b16 %v1480
        %v1507 = vunpack.c.h.b16 %v1480
        %v1508 = vunpack.c.l.b16 %v1481
        %v1509 = vunpack.c.h.b16 %v1481
        %v1510 = vunpack.c.l.b16 %v1482
        %v1511 = vunpack.c.h.b16 %v1482
        %v1512 = vunpack.c.l.b16 %v1483
        %v1513 = vunpack.c.h.b16 %v1483
        %v1514 = vunpack.c.l.b16 %v1484
        %v1515 = vunpack.c.h.b16 %v1484
        %v1516 = vunpack.c.l.b16 %v1485
        %v1517 = vunpack.c.h.b16 %v1485
        %v1518 = vunpack.c.l.b16 %v1486
        %v1519 = vunpack.c.h.b16 %v1486
        %v1520 = vunpack.c.l.b16 %v1487
        %v1521 = vunpack.c.h.b16 %v1487
        %v1522 = vunpack.c.l.b16 %v1488
        %v1523 = vunpack.c.h.b16 %v1488
        %v1524 = vpack.c.b16 %v1504, %v1502
        %v1525 = vpack.c.b16 %v1505, %v1503
        %v1526 = vpack.c.b16 %v1508, %v1506
        %v1527 = vpack.c.b16 %v1509, %v1507
        %v1528 = vpack.c.b16 %v1512, %v1510
        %v1529 = vpack.c.b16 %v1513, %v1511
        %v1530 = vpack.c.b16 %v1516, %v1514
        %v1531 = vpack.c.b16 %v1517, %v1515
        %v1532 = vpack.c.b16 %v1520, %v1518
        %v1533 = vpack.c.b16 %v1521, %v1519
        %v1534 = vpack.c.b16 %v1522, %v1522
        %v1535 = vpack.c.b16 %v1523, %v1523
        %v1547 = vsel %vm1279, %v1490, 0
        %v1550 = vsel %vm1283, %v1534, 0
        %v1553 = vsel %vm1283, %v1535, 0
        %1555 = vmatprep.subr.bf16.mxu0 0
        %1556 = vmatpush1.bf16.msra.mxu0 0
        %1557 = vmatprep.subr.bf16.mxu0 0
        %1558 = vmatpush1.bf16.msra.mxu0 0
        %1559 = vmatprep.subr.bf16.mxu0 %v1553
        %1560 = vmatpush1.bf16.msra.mxu0 %v1550
        %1561 = vmatprep.subr.bf16.mxu0 %v1533
        %1562 = vmatpush1.bf16.msra.mxu0 %v1532
        %1563 = vmatprep.subr.bf16.mxu0 %v1531
        %1564 = vmatpush1.bf16.msra.mxu0 %v1530
        %1565 = vmatprep.subr.bf16.mxu0 %v1529
        %1566 = vmatpush1.bf16.msra.mxu0 %v1528
        %1567 = vmatprep.subr.bf16.mxu0 %v1527
        %1568 = vmatpush1.bf16.msra.mxu0 %v1526
        %1569 = vmatprep.subr.bf16.mxu0 %v1525
        %1570 = vmatpush1.bf16.msra.mxu0 %v1524
        %1571 = vmatprep.subr.bf16.mxu0 0
        %1572 = vmatpush2.bf16.msra.mxu0 0
        %1573 = vmatprep.subr.bf16.mxu0 0
        %1574 = vmatpush2.bf16.msra.mxu0 0
        %1575 = vmatprep.subr.bf16.mxu0 0
        %1576 = vmatpush2.bf16.msra.mxu0 0
        %1577 = vmatprep.subr.bf16.mxu0 0
        %1578 = vmatpush2.bf16.msra.mxu0 0
        %1579 = vmatprep.subr.bf16.mxu0 0
        %1580 = vmatpush2.bf16.msra.mxu0 0
        %1581 = vmatprep.subr.bf16.mxu0 0
        %1582 = vmatpush2.bf16.msra.mxu0 0
        %1583 = vmatprep.subr.bf16.mxu0 0
        %1584 = vmatpush2.bf16.msra.mxu0 0
        %1585 = vmatprep.subr.bf16.mxu0 0
        %1586 = vmatpush2.bf16.msra.mxu0 0
        %1587 = vmatprep.mubr.bf16.mxu0 0
        %1588 = vmatmul.mubr.bf16.gmra.mxu0 %v1547
        %v1589 = vpop.f32.mrf.mxu0
        %v1590 = vadd.f32 0.0, %v1589
        %v1591 = vpop.f32.mrf.mxu0
        %v1592 = vadd.f32 0.0, %v1591
        %v1593 = vpop.f32.mrf.mxu0
        %v1594 = vadd.f32 0.0, %v1593
        %v1595 = vpop.f32.mrf.mxu0
        %v1596 = vadd.f32 0.0, %v1595
        %1597 = vdwg.mxu0
        %v1598 = vadd.f32 %v1473, %v1590
        %v1599 = vadd.f32 %v1474, %v1592
        %v1600 = vadd.f32 %v1475, %v1594
        %v1601 = vadd.f32 %v1476, %v1596
        %s1602 = scalar_lea.vmem %s5, 264
        %v1603 = vld [vmem:[%s1602] sm:$0xff]
        %v1604 = vld [vmem:[%s1602 + $0x8] sm:$0xff]
        %v1605 = vld [vmem:[%s1602 + $0x10] sm:$0xff]
        %v1606 = vld [vmem:[%s1602 + $0x18] sm:$0xff]
        %v1607 = vld [vmem:[%s1602 + $0x20] sm:$0xff]
        %v1608 = vld [vmem:[%s1602 + $0x28] sm:$0xff]
        %v1609 = vld [vmem:[%s1602 + $0x30] sm:$0xff]
        %v1610 = vld [vmem:[%s1602 + $0x38] sm:$0xff]
        %v1611 = vld [vmem:[%s1602 + $0x40] sm:$0xff]
        %v1612 = vld [vmem:[%s1602 + $0x48] sm:$0xff]
        %v1613 = vld [vmem:[%s1602 + $0x50] sm:$0x33]
        %v1614 = vrot.slane %v1360, 1
        %v1615 = vrot.slane %v1362, 2
        %v1616 = vor.u32 %v1614, %v1615
        %v1628 = vunpack.c.l.b16 %v1603
        %v1629 = vunpack.c.h.b16 %v1603
        %v1630 = vunpack.c.l.b16 %v1604
        %v1631 = vunpack.c.h.b16 %v1604
        %v1632 = vunpack.c.l.b16 %v1605
        %v1633 = vunpack.c.h.b16 %v1605
        %v1634 = vunpack.c.l.b16 %v1606
        %v1635 = vunpack.c.h.b16 %v1606
        %v1636 = vunpack.c.l.b16 %v1607
        %v1637 = vunpack.c.h.b16 %v1607
        %v1638 = vunpack.c.l.b16 %v1608
        %v1639 = vunpack.c.h.b16 %v1608
        %v1640 = vunpack.c.l.b16 %v1609
        %v1641 = vunpack.c.h.b16 %v1609
        %v1642 = vunpack.c.l.b16 %v1610
        %v1643 = vunpack.c.h.b16 %v1610
        %v1644 = vunpack.c.l.b16 %v1611
        %v1645 = vunpack.c.h.b16 %v1611
        %v1646 = vunpack.c.l.b16 %v1612
        %v1647 = vunpack.c.h.b16 %v1612
        %v1648 = vunpack.c.l.b16 %v1613
        %v1649 = vunpack.c.h.b16 %v1613
        %v1650 = vpack.c.b16 %v1630, %v1628
        %v1651 = vpack.c.b16 %v1631, %v1629
        %v1652 = vpack.c.b16 %v1634, %v1632
        %v1653 = vpack.c.b16 %v1635, %v1633
        %v1654 = vpack.c.b16 %v1638, %v1636
        %v1655 = vpack.c.b16 %v1639, %v1637
        %v1656 = vpack.c.b16 %v1642, %v1640
        %v1657 = vpack.c.b16 %v1643, %v1641
        %v1658 = vpack.c.b16 %v1646, %v1644
        %v1659 = vpack.c.b16 %v1647, %v1645
        %v1660 = vpack.c.b16 %v1648, %v1648
        %v1661 = vpack.c.b16 %v1649, %v1649
        %v1673 = vsel %vm1279, %v1616, 0
        %v1676 = vsel %vm1283, %v1660, 0
        %v1679 = vsel %vm1283, %v1661, 0
        %1681 = vmatprep.subr.bf16.mxu0 0
        %1682 = vmatpush1.bf16.msra.mxu0 0
        %1683 = vmatprep.subr.bf16.mxu0 0
        %1684 = vmatpush1.bf16.msra.mxu0 0
        %1685 = vmatprep.subr.bf16.mxu0 %v1679
        %1686 = vmatpush1.bf16.msra.mxu0 %v1676
        %1687 = vmatprep.subr.bf16.mxu0 %v1659
        %1688 = vmatpush1.bf16.msra.mxu0 %v1658
        %1689 = vmatprep.subr.bf16.mxu0 %v1657
        %1690 = vmatpush1.bf16.msra.mxu0 %v1656
        %1691 = vmatprep.subr.bf16.mxu0 %v1655
        %1692 = vmatpush1.bf16.msra.mxu0 %v1654
        %1693 = vmatprep.subr.bf16.mxu0 %v1653
        %1694 = vmatpush1.bf16.msra.mxu0 %v1652
        %1695 = vmatprep.subr.bf16.mxu0 %v1651
        %1696 = vmatpush1.bf16.msra.mxu0 %v1650
        %1697 = vmatprep.subr.bf16.mxu0 0
        %1698 = vmatpush2.bf16.msra.mxu0 0
        %1699 = vmatprep.subr.bf16.mxu0 0
        %1700 = vmatpush2.bf16.msra.mxu0 0
        %1701 = vmatprep.subr.bf16.mxu0 0
        %1702 = vmatpush2.bf16.msra.mxu0 0
        %1703 = vmatprep.subr.bf16.mxu0 0
        %1704 = vmatpush2.bf16.msra.mxu0 0
        %1705 = vmatprep.subr.bf16.mxu0 0
        %1706 = vmatpush2.bf16.msra.mxu0 0
        %1707 = vmatprep.subr.bf16.mxu0 0
        %1708 = vmatpush2.bf16.msra.mxu0 0
        %1709 = vmatprep.subr.bf16.mxu0 0
        %1710 = vmatpush2.bf16.msra.mxu0 0
        %1711 = vmatprep.subr.bf16.mxu0 0
        %1712 = vmatpush2.bf16.msra.mxu0 0
        %1713 = vmatprep.mubr.bf16.mxu0 0
        %1714 = vmatmul.mubr.bf16.gmra.mxu0 %v1673
        %v1715 = vpop.f32.mrf.mxu0
        %v1716 = vadd.f32 0.0, %v1715
        %v1717 = vpop.f32.mrf.mxu0
        %v1718 = vadd.f32 0.0, %v1717
        %v1719 = vpop.f32.mrf.mxu0
        %v1720 = vadd.f32 0.0, %v1719
        %v1721 = vpop.f32.mrf.mxu0
        %v1722 = vadd.f32 0.0, %v1721
        %1723 = vdwg.mxu0
        %v1724 = vadd.f32 %v1598, %v1716
        %v1725 = vadd.f32 %v1599, %v1718
        %v1726 = vadd.f32 %v1600, %v1720
        %v1727 = vadd.f32 %v1601, %v1722
        %s1728 = scalar_lea.vmem %s5, 352
        %v1729 = vld [vmem:[%s1728] sm:$0xff]
        %v1730 = vld [vmem:[%s1728 + $0x8] sm:$0xff]
        %v1731 = vld [vmem:[%s1728 + $0x10] sm:$0xff]
        %v1732 = vld [vmem:[%s1728 + $0x18] sm:$0xff]
        %v1733 = vld [vmem:[%s1728 + $0x20] sm:$0xff]
        %v1734 = vld [vmem:[%s1728 + $0x28] sm:$0xff]
        %v1735 = vld [vmem:[%s1728 + $0x30] sm:$0xff]
        %v1736 = vld [vmem:[%s1728 + $0x38] sm:$0xff]
        %v1737 = vld [vmem:[%s1728 + $0x40] sm:$0xff]
        %v1738 = vld [vmem:[%s1728 + $0x48] sm:$0xff]
        %v1739 = vld [vmem:[%s1728 + $0x50] sm:$0x33]
        %v1740 = vrot.slane %v1223, 2
        %v1752 = vunpack.c.l.b16 %v1729
        %v1753 = vunpack.c.h.b16 %v1729
        %v1754 = vunpack.c.l.b16 %v1730
        %v1755 = vunpack.c.h.b16 %v1730
        %v1756 = vunpack.c.l.b16 %v1731
        %v1757 = vunpack.c.h.b16 %v1731
        %v1758 = vunpack.c.l.b16 %v1732
        %v1759 = vunpack.c.h.b16 %v1732
        %v1760 = vunpack.c.l.b16 %v1733
        %v1761 = vunpack.c.h.b16 %v1733
        %v1762 = vunpack.c.l.b16 %v1734
        %v1763 = vunpack.c.h.b16 %v1734
        %v1764 = vunpack.c.l.b16 %v1735
        %v1765 = vunpack.c.h.b16 %v1735
        %v1766 = vunpack.c.l.b16 %v1736
        %v1767 = vunpack.c.h.b16 %v1736
        %v1768 = vunpack.c.l.b16 %v1737
        %v1769 = vunpack.c.h.b16 %v1737
        %v1770 = vunpack.c.l.b16 %v1738
        %v1771 = vunpack.c.h.b16 %v1738
        %v1772 = vunpack.c.l.b16 %v1739
        %v1773 = vunpack.c.h.b16 %v1739
        %v1774 = vpack.c.b16 %v1754, %v1752
        %v1775 = vpack.c.b16 %v1755, %v1753
        %v1776 = vpack.c.b16 %v1758, %v1756
        %v1777 = vpack.c.b16 %v1759, %v1757
        %v1778 = vpack.c.b16 %v1762, %v1760
        %v1779 = vpack.c.b16 %v1763, %v1761
        %v1780 = vpack.c.b16 %v1766, %v1764
        %v1781 = vpack.c.b16 %v1767, %v1765
        %v1782 = vpack.c.b16 %v1770, %v1768
        %v1783 = vpack.c.b16 %v1771, %v1769
        %v1784 = vpack.c.b16 %v1772, %v1772
        %v1785 = vpack.c.b16 %v1773, %v1773
        %v1797 = vsel %vm1279, %v1740, 0
        %v1800 = vsel %vm1283, %v1784, 0
        %v1803 = vsel %vm1283, %v1785, 0
        %1805 = vmatprep.subr.bf16.mxu0 0
        %1806 = vmatpush1.bf16.msra.mxu0 0
        %1807 = vmatprep.subr.bf16.mxu0 0
        %1808 = vmatpush1.bf16.msra.mxu0 0
        %1809 = vmatprep.subr.bf16.mxu0 %v1803
        %1810 = vmatpush1.bf16.msra.mxu0 %v1800
        %1811 = vmatprep.subr.bf16.mxu0 %v1783
        %1812 = vmatpush1.bf16.msra.mxu0 %v1782
        %1813 = vmatprep.subr.bf16.mxu0 %v1781
        %1814 = vmatpush1.bf16.msra.mxu0 %v1780
        %1815 = vmatprep.subr.bf16.mxu0 %v1779
        %1816 = vmatpush1.bf16.msra.mxu0 %v1778
        %1817 = vmatprep.subr.bf16.mxu0 %v1777
        %1818 = vmatpush1.bf16.msra.mxu0 %v1776
        %1819 = vmatprep.subr.bf16.mxu0 %v1775
        %1820 = vmatpush1.bf16.msra.mxu0 %v1774
        %1821 = vmatprep.subr.bf16.mxu0 0
        %1822 = vmatpush2.bf16.msra.mxu0 0
        %1823 = vmatprep.subr.bf16.mxu0 0
        %1824 = vmatpush2.bf16.msra.mxu0 0
        %1825 = vmatprep.subr.bf16.mxu0 0
        %1826 = vmatpush2.bf16.msra.mxu0 0
        %1827 = vmatprep.subr.bf16.mxu0 0
        %1828 = vmatpush2.bf16.msra.mxu0 0
        %1829 = vmatprep.subr.bf16.mxu0 0
        %1830 = vmatpush2.bf16.msra.mxu0 0
        %1831 = vmatprep.subr.bf16.mxu0 0
        %1832 = vmatpush2.bf16.msra.mxu0 0
        %1833 = vmatprep.subr.bf16.mxu0 0
        %1834 = vmatpush2.bf16.msra.mxu0 0
        %1835 = vmatprep.subr.bf16.mxu0 0
        %1836 = vmatpush2.bf16.msra.mxu0 0
        %1837 = vmatprep.mubr.bf16.mxu0 0
        %1838 = vmatmul.mubr.bf16.gmra.mxu0 %v1797
        %v1839 = vpop.f32.mrf.mxu0
        %v1840 = vadd.f32 0.0, %v1839
        %v1841 = vpop.f32.mrf.mxu0
        %v1842 = vadd.f32 0.0, %v1841
        %v1843 = vpop.f32.mrf.mxu0
        %v1844 = vadd.f32 0.0, %v1843
        %v1845 = vpop.f32.mrf.mxu0
        %v1846 = vadd.f32 0.0, %v1845
        %1847 = vdwg.mxu0
        %v1848 = vadd.f32 %v1724, %v1840
        %v1849 = vadd.f32 %v1725, %v1842
        %v1850 = vadd.f32 %v1726, %v1844
        %v1851 = vadd.f32 %v1727, %v1846
        %v1852 = vmax.f32 %v1848, 0.0
        %v1853 = vmax.f32 %v1849, 0.0
        %v1854 = vmax.f32 %v1850, 0.0
        %v1855 = vmax.f32 %v1851, 0.0
        %v1856 = vld [vmem:[%s7] sm:$0x7]
        %v1857 = vpack.c.bf16 %v1854, %v1852
        %v1858 = vpack.c.bf16 %v1855, %v1853
        %vm1859 = vcmask 80896
        %v1861 = vsel %vm1859, %v1856, 0
        %vm1863 = vcmask 1044480
        %v1865 = vsel %vm1863, %v1857, 0
        %v1868 = vsel %vm1863, %v1858, 0
        %1870 = vmatprep.subr.bf16.mxu0 0
        %1871 = vmatpush1.bf16.msra.mxu0 0
        %1872 = vmatprep.subr.bf16.mxu0 0
        %1873 = vmatpush1.bf16.msra.mxu0 0
        %1874 = vmatprep.subr.bf16.mxu0 0
        %1875 = vmatpush1.bf16.msra.mxu0 0
        %1876 = vmatprep.subr.bf16.mxu0 0
        %1877 = vmatpush1.bf16.msra.mxu0 0
        %1878 = vmatprep.subr.bf16.mxu0 0
        %1879 = vmatpush1.bf16.msra.mxu0 0
        %1880 = vmatprep.subr.bf16.mxu0 0
        %1881 = vmatpush1.bf16.msra.mxu0 0
        %1882 = vmatprep.subr.bf16.mxu0 0
        %1883 = vmatpush1.bf16.msra.mxu0 0
        %1884 = vmatprep.subr.bf16.mxu0 %v1868
        %1885 = vmatpush1.bf16.msra.mxu0 %v1865
        %1886 = vmatprep.subr.bf16.mxu0 0
        %1887 = vmatpush2.bf16.msra.mxu0 0
        %1888 = vmatprep.subr.bf16.mxu0 0
        %1889 = vmatpush2.bf16.msra.mxu0 0
        %1890 = vmatprep.subr.bf16.mxu0 0
        %1891 = vmatpush2.bf16.msra.mxu0 0
        %1892 = vmatprep.subr.bf16.mxu0 0
        %1893 = vmatpush2.bf16.msra.mxu0 0
        %1894 = vmatprep.subr.bf16.mxu0 0
        %1895 = vmatpush2.bf16.msra.mxu0 0
        %1896 = vmatprep.subr.bf16.mxu0 0
        %1897 = vmatpush2.bf16.msra.mxu0 0
        %1898 = vmatprep.subr.bf16.mxu0 0
        %1899 = vmatpush2.bf16.msra.mxu0 0
        %1900 = vmatprep.subr.bf16.mxu0 0
        %1901 = vmatpush2.bf16.msra.mxu0 0
        %1902 = vmatprep.mubr.bf16.mxu0 0
        %1903 = vmatmul.mubr.bf16.gmra.mxu0 %v1861
        %v1904 = vpop.f32.mrf.mxu0
        %v1905 = vadd.f32 0.0, %v1904
        %v1906 = vpop.f32.mrf.mxu0
        %v1907 = vadd.f32 0.0, %v1906
        %v1908 = vpop.f32.mrf.mxu0
        %v1909 = vpop.f32.mrf.mxu0
        %1910 = vdwg.mxu0
        %v1911 = vld [vmem:[%s8] sm:$0xf]
        %v1912 = vld [vmem:[%s8 + $0x4] sm:$0xf]
        %v1913 = vld [vmem:[%s8 + $0x8] sm:$0xf]
        %v1914 = vld [vmem:[%s8 + $0xc] sm:$0xf]
        %v1915 = vld [vmem:[%s8 + $0x10] sm:$0xf]
        %v1916 = vld [vmem:[%s8 + $0x14] sm:$0xf]
        %v1917 = vld [vmem:[%s8 + $0x18] sm:$0xf]
        %v1918 = vld [vmem:[%s8 + $0x1c] sm:$0xf]
        %v1919 = vld [vmem:[%s8 + $0x20] sm:$0xf]
        %v1920 = vld [vmem:[%s8 + $0x24] sm:$0xf]
        %v1921 = vld [vmem:[%s8 + $0x28] sm:$0xf]
        %v1922 = vld [vmem:[%s8 + $0x2c] sm:$0xf]
        %v1923 = vld [vmem:[%s8 + $0x30] sm:$0xf]
        %v1924 = vld [vmem:[%s8 + $0x34] sm:$0xf]
        %v1925 = vld [vmem:[%s8 + $0x38] sm:$0xf]
        %v1926 = vld [vmem:[%s8 + $0x3c] sm:$0xf]
        %v1927 = vld [vmem:[%s8 + $0x40] sm:$0xf]
        %v1928 = vld [vmem:[%s8 + $0x44] sm:$0xf]
        %v1929 = vld [vmem:[%s8 + $0x48] sm:$0xf]
        %v1930 = vld [vmem:[%s8 + $0x4c] sm:$0xf]
        %v1931 = vpack.c.bf16 %v1905, %v1905
        %v1932 = vpack.c.bf16 %v1907, %v1907
        %v1953 = vunpack.c.l.b16 %v1911
        %v1954 = vunpack.c.l.b16 %v1912
        %v1955 = vunpack.c.l.b16 %v1913
        %v1956 = vunpack.c.l.b16 %v1914
        %v1957 = vunpack.c.l.b16 %v1915
        %v1958 = vunpack.c.l.b16 %v1916
        %v1959 = vunpack.c.l.b16 %v1917
        %v1960 = vunpack.c.l.b16 %v1918
        %v1961 = vunpack.c.l.b16 %v1919
        %v1962 = vunpack.c.l.b16 %v1920
        %v1963 = vunpack.c.l.b16 %v1921
        %v1964 = vunpack.c.l.b16 %v1922
        %v1965 = vunpack.c.l.b16 %v1923
        %v1966 = vunpack.c.l.b16 %v1924
        %v1967 = vunpack.c.l.b16 %v1925
        %v1968 = vunpack.c.l.b16 %v1926
        %v1969 = vunpack.c.l.b16 %v1927
        %v1970 = vunpack.c.l.b16 %v1928
        %v1971 = vunpack.c.l.b16 %v1929
        %v1972 = vunpack.c.l.b16 %v1930
        %v1973 = vpack.c.b16 %v1954, %v1953
        %v1974 = vpack.c.b16 %v1956, %v1955
        %v1975 = vpack.c.b16 %v1958, %v1957
        %v1976 = vpack.c.b16 %v1960, %v1959
        %v1977 = vpack.c.b16 %v1962, %v1961
        %v1978 = vpack.c.b16 %v1964, %v1963
        %v1979 = vpack.c.b16 %v1966, %v1965
        %v1980 = vpack.c.b16 %v1968, %v1967
        %v1981 = vpack.c.b16 %v1970, %v1969
        %v1982 = vpack.c.b16 %v1972, %v1971
        %v1994 = vsel %vm524, %v1932, 0
        %1996 = vmatprep.subr.bf16.mxu0 0
        %1997 = vmatpush1.bf16.msra.mxu0 %v1980
        %1998 = vmatprep.subr.bf16.mxu0 0
        %1999 = vmatpush1.bf16.msra.mxu0 %v1979
        %2000 = vmatprep.subr.bf16.mxu0 0
        %2001 = vmatpush1.bf16.msra.mxu0 %v1978
        %2002 = vmatprep.subr.bf16.mxu0 0
        %2003 = vmatpush1.bf16.msra.mxu0 %v1977
        %2004 = vmatprep.subr.bf16.mxu0 0
        %2005 = vmatpush1.bf16.msra.mxu0 %v1976
        %2006 = vmatprep.subr.bf16.mxu0 0
        %2007 = vmatpush1.bf16.msra.mxu0 %v1975
        %2008 = vmatprep.subr.bf16.mxu0 0
        %2009 = vmatpush1.bf16.msra.mxu0 %v1974
        %2010 = vmatprep.subr.bf16.mxu0 0
        %2011 = vmatpush1.bf16.msra.mxu0 %v1973
        %2012 = vmatprep.subr.bf16.mxu0 0
        %2013 = vmatpush2.bf16.msra.mxu0 0
        %2014 = vmatprep.subr.bf16.mxu0 0
        %2015 = vmatpush2.bf16.msra.mxu0 0
        %2016 = vmatprep.subr.bf16.mxu0 0
        %2017 = vmatpush2.bf16.msra.mxu0 0
        %2018 = vmatprep.subr.bf16.mxu0 0
        %2019 = vmatpush2.bf16.msra.mxu0 0
        %2020 = vmatprep.subr.bf16.mxu0 0
        %2021 = vmatpush2.bf16.msra.mxu0 0
        %2022 = vmatprep.subr.bf16.mxu0 0
        %2023 = vmatpush2.bf16.msra.mxu0 0
        %2024 = vmatprep.subr.bf16.mxu0 0
        %2025 = vmatpush2.bf16.msra.mxu0 %v1982
        %2026 = vmatprep.subr.bf16.mxu0 0
        %2027 = vmatpush2.bf16.msra.mxu0 %v1981
        %2028 = vmatprep.mubr.bf16.mxu0 %v1994
        %2029 = vmatmul.mubr.bf16.gmra.mxu0 %v1931
        %v2030 = vpop.f32.mrf.mxu0
        %v2031 = vadd.f32 0.0, %v2030
        %v2032 = vpop.f32.mrf.mxu0
        %v2033 = vpop.f32.mrf.mxu0
        %v2034 = vpop.f32.mrf.mxu0
        %2035 = vdwg.mxu0
        %v2036 = vld [vmem:[%s10] sm:$0x1]
        %v2037 = vld [vmem:[%s9] sm:$0xf]
        %v2038 = vld [vmem:[%s9 + $0x4] sm:$0xf]
        %v2039 = vld [vmem:[%s9 + $0x8] sm:$0xf]
        %v2040 = vld [vmem:[%s9 + $0xc] sm:$0xf]
        %v2041 = vld [vmem:[%s9 + $0x10] sm:$0xf]
        %v2042 = vld [vmem:[%s9 + $0x14] sm:$0xf]
        %v2043 = vld [vmem:[%s9 + $0x18] sm:$0xf]
        %v2044 = vld [vmem:[%s9 + $0x1c] sm:$0xf]
        %v2045 = vld [vmem:[%s9 + $0x20] sm:$0xf]
        %v2046 = vld [vmem:[%s9 + $0x24] sm:$0xf]
        %v2047 = vpack.c.bf16 %v2031, %v2031
        %v2058 = vunpack.c.l.b16 %v2037
        %v2059 = vunpack.c.l.b16 %v2038
        %v2060 = vunpack.c.l.b16 %v2039
        %v2061 = vunpack.c.l.b16 %v2040
        %v2062 = vunpack.c.l.b16 %v2041
        %v2063 = vunpack.c.l.b16 %v2042
        %v2064 = vunpack.c.l.b16 %v2043
        %v2065 = vunpack.c.l.b16 %v2044
        %v2066 = vunpack.c.l.b16 %v2045
        %v2067 = vunpack.c.l.b16 %v2046
        %v2068 = vpack.c.b16 %v2059, %v2058
        %v2069 = vpack.c.b16 %v2061, %v2060
        %v2070 = vpack.c.b16 %v2063, %v2062
        %v2071 = vpack.c.b16 %v2065, %v2064
        %v2072 = vpack.c.b16 %v2067, %v2066
        %vm2078 = vcmask 654336
        %v2080 = vsel %vm2078, %v2047, 0
        %2082 = vmatprep.subr.bf16.mxu0 0
        %2083 = vmatpush1.bf16.msra.mxu0 0
        %2084 = vmatprep.subr.bf16.mxu0 0
        %2085 = vmatpush1.bf16.msra.mxu0 0
        %2086 = vmatprep.subr.bf16.mxu0 0
        %2087 = vmatpush1.bf16.msra.mxu0 0
        %2088 = vmatprep.subr.bf16.mxu0 0
        %2089 = vmatpush1.bf16.msra.mxu0 %v2072
        %2090 = vmatprep.subr.bf16.mxu0 0
        %2091 = vmatpush1.bf16.msra.mxu0 %v2071
        %2092 = vmatprep.subr.bf16.mxu0 0
        %2093 = vmatpush1.bf16.msra.mxu0 %v2070
        %2094 = vmatprep.subr.bf16.mxu0 0
        %2095 = vmatpush1.bf16.msra.mxu0 %v2069
        %2096 = vmatprep.subr.bf16.mxu0 0
        %2097 = vmatpush1.bf16.msra.mxu0 %v2068
        %2098 = vmatprep.subr.bf16.mxu0 0
        %2099 = vmatpush2.bf16.msra.mxu0 0
        %2100 = vmatprep.subr.bf16.mxu0 0
        %2101 = vmatpush2.bf16.msra.mxu0 0
        %2102 = vmatprep.subr.bf16.mxu0 0
        %2103 = vmatpush2.bf16.msra.mxu0 0
        %2104 = vmatprep.subr.bf16.mxu0 0
        %2105 = vmatpush2.bf16.msra.mxu0 0
        %2106 = vmatprep.subr.bf16.mxu0 0
        %2107 = vmatpush2.bf16.msra.mxu0 0
        %2108 = vmatprep.subr.bf16.mxu0 0
        %2109 = vmatpush2.bf16.msra.mxu0 0
        %2110 = vmatprep.subr.bf16.mxu0 0
        %2111 = vmatpush2.bf16.msra.mxu0 0
        %2112 = vmatprep.subr.bf16.mxu0 0
        %2113 = vmatpush2.bf16.msra.mxu0 0
        %2114 = vmatprep.mubr.bf16.mxu0 0
        %2115 = vmatmul.mubr.bf16.gmra.mxu0 %v2080
        %v2116 = vpop.f32.mrf.mxu0
        %v2117 = vadd.f32 0.0, %v2116
        %v2118 = vpop.f32.mrf.mxu0
        %v2119 = vpop.f32.mrf.mxu0
        %v2120 = vpop.f32.mrf.mxu0
        %2121 = vdwg.mxu0
        %v2122 = vadd.f32 %v2036, %v2117
        %s2123 = scalar_lea.vmem %s9, 40
        %v2124 = vld [vmem:[%s2123] sm:$0xf]
        %v2125 = vld [vmem:[%s2123 + $0x4] sm:$0xf]
        %v2126 = vld [vmem:[%s2123 + $0x8] sm:$0xf]
        %v2127 = vld [vmem:[%s2123 + $0xc] sm:$0xf]
        %v2128 = vld [vmem:[%s2123 + $0x10] sm:$0xf]
        %v2129 = vld [vmem:[%s2123 + $0x14] sm:$0xf]
        %v2130 = vld [vmem:[%s2123 + $0x18] sm:$0xf]
        %v2131 = vld [vmem:[%s2123 + $0x1c] sm:$0xf]
        %v2132 = vld [vmem:[%s2123 + $0x20] sm:$0xf]
        %v2133 = vld [vmem:[%s2123 + $0x24] sm:$0xf]
        %v2134 = vshrl.u32 %v2047, 16
        %v2146 = vunpack.c.l.b16 %v2124
        %v2147 = vunpack.c.l.b16 %v2125
        %v2148 = vunpack.c.l.b16 %v2126
        %v2149 = vunpack.c.l.b16 %v2127
        %v2150 = vunpack.c.l.b16 %v2128
        %v2151 = vunpack.c.l.b16 %v2129
        %v2152 = vunpack.c.l.b16 %v2130
        %v2153 = vunpack.c.l.b16 %v2131
        %v2154 = vunpack.c.l.b16 %v2132
        %v2155 = vunpack.c.l.b16 %v2133
        %v2156 = vpack.c.b16 %v2147, %v2146
        %v2157 = vpack.c.b16 %v2149, %v2148
        %v2158 = vpack.c.b16 %v2151, %v2150
        %v2159 = vpack.c.b16 %v2153, %v2152
        %v2160 = vpack.c.b16 %v2155, %v2154
        %v2167 = vsel %vm2078, %v2134, 0
        %2169 = vmatprep.subr.bf16.mxu0 0
        %2170 = vmatpush1.bf16.msra.mxu0 0
        %2171 = vmatprep.subr.bf16.mxu0 0
        %2172 = vmatpush1.bf16.msra.mxu0 0
        %2173 = vmatprep.subr.bf16.mxu0 0
        %2174 = vmatpush1.bf16.msra.mxu0 0
        %2175 = vmatprep.subr.bf16.mxu0 0
        %2176 = vmatpush1.bf16.msra.mxu0 %v2160
        %2177 = vmatprep.subr.bf16.mxu0 0
        %2178 = vmatpush1.bf16.msra.mxu0 %v2159
        %2179 = vmatprep.subr.bf16.mxu0 0
        %2180 = vmatpush1.bf16.msra.mxu0 %v2158
        %2181 = vmatprep.subr.bf16.mxu0 0
        %2182 = vmatpush1.bf16.msra.mxu0 %v2157
        %2183 = vmatprep.subr.bf16.mxu0 0
        %2184 = vmatpush1.bf16.msra.mxu0 %v2156
        %2185 = vmatprep.subr.bf16.mxu0 0
        %2186 = vmatpush2.bf16.msra.mxu0 0
        %2187 = vmatprep.subr.bf16.mxu0 0
        %2188 = vmatpush2.bf16.msra.mxu0 0
        %2189 = vmatprep.subr.bf16.mxu0 0
        %2190 = vmatpush2.bf16.msra.mxu0 0
        %2191 = vmatprep.subr.bf16.mxu0 0
        %2192 = vmatpush2.bf16.msra.mxu0 0
        %2193 = vmatprep.subr.bf16.mxu0 0
        %2194 = vmatpush2.bf16.msra.mxu0 0
        %2195 = vmatprep.subr.bf16.mxu0 0
        %2196 = vmatpush2.bf16.msra.mxu0 0
        %2197 = vmatprep.subr.bf16.mxu0 0
        %2198 = vmatpush2.bf16.msra.mxu0 0
        %2199 = vmatprep.subr.bf16.mxu0 0
        %2200 = vmatpush2.bf16.msra.mxu0 0
        %2201 = vmatprep.mubr.bf16.mxu0 0
        %2202 = vmatmul.mubr.bf16.gmra.mxu0 %v2167
        %v2203 = vpop.f32.mrf.mxu0
        %v2204 = vadd.f32 0.0, %v2203
        %v2205 = vpop.f32.mrf.mxu0
        %v2206 = vpop.f32.mrf.mxu0
        %v2207 = vpop.f32.mrf.mxu0
        %2208 = vdwg.mxu0
        %v2209 = vadd.f32 %v2122, %v2204
        %s2210 = scalar_lea.vmem %s9, 80
        %v2211 = vld [vmem:[%s2210] sm:$0xf]
        %v2212 = vld [vmem:[%s2210 + $0x4] sm:$0xf]
        %v2213 = vld [vmem:[%s2210 + $0x8] sm:$0xf]
        %v2214 = vld [vmem:[%s2210 + $0xc] sm:$0xf]
        %v2215 = vld [vmem:[%s2210 + $0x10] sm:$0xf]
        %v2216 = vld [vmem:[%s2210 + $0x14] sm:$0xf]
        %v2217 = vld [vmem:[%s2210 + $0x18] sm:$0xf]
        %v2218 = vld [vmem:[%s2210 + $0x1c] sm:$0xf]
        %v2219 = vld [vmem:[%s2210 + $0x20] sm:$0xf]
        %v2220 = vld [vmem:[%s2210 + $0x24] sm:$0xf]
        %v2222 = vrot.slane %v2047, 1
        %v2233 = vunpack.c.l.b16 %v2211
        %v2234 = vunpack.c.l.b16 %v2212
        %v2235 = vunpack.c.l.b16 %v2213
        %v2236 = vunpack.c.l.b16 %v2214
        %v2237 = vunpack.c.l.b16 %v2215
        %v2238 = vunpack.c.l.b16 %v2216
        %v2239 = vunpack.c.l.b16 %v2217
        %v2240 = vunpack.c.l.b16 %v2218
        %v2241 = vunpack.c.l.b16 %v2219
        %v2242 = vunpack.c.l.b16 %v2220
        %v2243 = vpack.c.b16 %v2234, %v2233
        %v2244 = vpack.c.b16 %v2236, %v2235
        %v2245 = vpack.c.b16 %v2238, %v2237
        %v2246 = vpack.c.b16 %v2240, %v2239
        %v2247 = vpack.c.b16 %v2242, %v2241
        %v2254 = vsel %vm2078, %v2222, 0
        %2256 = vmatprep.subr.bf16.mxu0 0
        %2257 = vmatpush1.bf16.msra.mxu0 0
        %2258 = vmatprep.subr.bf16.mxu0 0
        %2259 = vmatpush1.bf16.msra.mxu0 0
        %2260 = vmatprep.subr.bf16.mxu0 0
        %2261 = vmatpush1.bf16.msra.mxu0 0
        %2262 = vmatprep.subr.bf16.mxu0 0
        %2263 = vmatpush1.bf16.msra.mxu0 %v2247
        %2264 = vmatprep.subr.bf16.mxu0 0
        %2265 = vmatpush1.bf16.msra.mxu0 %v2246
        %2266 = vmatprep.subr.bf16.mxu0 0
        %2267 = vmatpush1.bf16.msra.mxu0 %v2245
        %2268 = vmatprep.subr.bf16.mxu0 0
        %2269 = vmatpush1.bf16.msra.mxu0 %v2244
        %2270 = vmatprep.subr.bf16.mxu0 0
        %2271 = vmatpush1.bf16.msra.mxu0 %v2243
        %2272 = vmatprep.subr.bf16.mxu0 0
        %2273 = vmatpush2.bf16.msra.mxu0 0
        %2274 = vmatprep.subr.bf16.mxu0 0
        %2275 = vmatpush2.bf16.msra.mxu0 0
        %2276 = vmatprep.subr.bf16.mxu0 0
        %2277 = vmatpush2.bf16.msra.mxu0 0
        %2278 = vmatprep.subr.bf16.mxu0 0
        %2279 = vmatpush2.bf16.msra.mxu0 0
        %2280 = vmatprep.subr.bf16.mxu0 0
        %2281 = vmatpush2.bf16.msra.mxu0 0
        %2282 = vmatprep.subr.bf16.mxu0 0
        %2283 = vmatpush2.bf16.msra.mxu0 0
        %2284 = vmatprep.subr.bf16.mxu0 0
        %2285 = vmatpush2.bf16.msra.mxu0 0
        %2286 = vmatprep.subr.bf16.mxu0 0
        %2287 = vmatpush2.bf16.msra.mxu0 0
        %2288 = vmatprep.mubr.bf16.mxu0 0
        %2289 = vmatmul.mubr.bf16.gmra.mxu0 %v2254
        %v2290 = vpop.f32.mrf.mxu0
        %v2291 = vadd.f32 0.0, %v2290
        %v2292 = vpop.f32.mrf.mxu0
        %v2293 = vpop.f32.mrf.mxu0
        %v2294 = vpop.f32.mrf.mxu0
        %2295 = vdwg.mxu0
        %v2296 = vadd.f32 %v2209, %v2291
        %s2297 = scalar_lea.vmem %s9, 120
        %v2298 = vld [vmem:[%s2297] sm:$0xf]
        %v2299 = vld [vmem:[%s2297 + $0x4] sm:$0xf]
        %v2300 = vld [vmem:[%s2297 + $0x8] sm:$0xf]
        %v2301 = vld [vmem:[%s2297 + $0xc] sm:$0xf]
        %v2302 = vld [vmem:[%s2297 + $0x10] sm:$0xf]
        %v2303 = vld [vmem:[%s2297 + $0x14] sm:$0xf]
        %v2304 = vld [vmem:[%s2297 + $0x18] sm:$0xf]
        %v2305 = vld [vmem:[%s2297 + $0x1c] sm:$0xf]
        %v2306 = vld [vmem:[%s2297 + $0x20] sm:$0xf]
        %v2307 = vld [vmem:[%s2297 + $0x24] sm:$0xf]
        %v2308 = vrot.slane %v2134, 1
        %v2319 = vunpack.c.l.b16 %v2298
        %v2320 = vunpack.c.l.b16 %v2299
        %v2321 = vunpack.c.l.b16 %v2300
        %v2322 = vunpack.c.l.b16 %v2301
        %v2323 = vunpack.c.l.b16 %v2302
        %v2324 = vunpack.c.l.b16 %v2303
        %v2325 = vunpack.c.l.b16 %v2304
        %v2326 = vunpack.c.l.b16 %v2305
        %v2327 = vunpack.c.l.b16 %v2306
        %v2328 = vunpack.c.l.b16 %v2307
        %v2329 = vpack.c.b16 %v2320, %v2319
        %v2330 = vpack.c.b16 %v2322, %v2321
        %v2331 = vpack.c.b16 %v2324, %v2323
        %v2332 = vpack.c.b16 %v2326, %v2325
        %v2333 = vpack.c.b16 %v2328, %v2327
        %v2340 = vsel %vm2078, %v2308, 0
        %2342 = vmatprep.subr.bf16.mxu0 0
        %2343 = vmatpush1.bf16.msra.mxu0 0
        %2344 = vmatprep.subr.bf16.mxu0 0
        %2345 = vmatpush1.bf16.msra.mxu0 0
        %2346 = vmatprep.subr.bf16.mxu0 0
        %2347 = vmatpush1.bf16.msra.mxu0 0
        %2348 = vmatprep.subr.bf16.mxu0 0
        %2349 = vmatpush1.bf16.msra.mxu0 %v2333
        %2350 = vmatprep.subr.bf16.mxu0 0
        %2351 = vmatpush1.bf16.msra.mxu0 %v2332
        %2352 = vmatprep.subr.bf16.mxu0 0
        %2353 = vmatpush1.bf16.msra.mxu0 %v2331
        %2354 = vmatprep.subr.bf16.mxu0 0
        %2355 = vmatpush1.bf16.msra.mxu0 %v2330
        %2356 = vmatprep.subr.bf16.mxu0 0
        %2357 = vmatpush1.bf16.msra.mxu0 %v2329
        %2358 = vmatprep.subr.bf16.mxu0 0
        %2359 = vmatpush2.bf16.msra.mxu0 0
        %2360 = vmatprep.subr.bf16.mxu0 0
        %2361 = vmatpush2.bf16.msra.mxu0 0
        %2362 = vmatprep.subr.bf16.mxu0 0
        %2363 = vmatpush2.bf16.msra.mxu0 0
        %2364 = vmatprep.subr.bf16.mxu0 0
        %2365 = vmatpush2.bf16.msra.mxu0 0
        %2366 = vmatprep.subr.bf16.mxu0 0
        %2367 = vmatpush2.bf16.msra.mxu0 0
        %2368 = vmatprep.subr.bf16.mxu0 0
        %2369 = vmatpush2.bf16.msra.mxu0 0
        %2370 = vmatprep.subr.bf16.mxu0 0
        %2371 = vmatpush2.bf16.msra.mxu0 0
        %2372 = vmatprep.subr.bf16.mxu0 0
        %2373 = vmatpush2.bf16.msra.mxu0 0
        %2374 = vmatprep.mubr.bf16.mxu0 0
        %2375 = vmatmul.mubr.bf16.gmra.mxu0 %v2340
        %v2376 = vpop.f32.mrf.mxu0
        %v2377 = vadd.f32 0.0, %v2376
        %v2378 = vpop.f32.mrf.mxu0
        %v2379 = vpop.f32.mrf.mxu0
        %v2380 = vpop.f32.mrf.mxu0
        %2381 = vdwg.mxu0
        %v2382 = vadd.f32 %v2296, %v2377
        %s2383 = scalar_lea.vmem %s9, 160
        %v2384 = vld [vmem:[%s2383] sm:$0xf]
        %v2385 = vld [vmem:[%s2383 + $0x4] sm:$0xf]
        %v2386 = vld [vmem:[%s2383 + $0x8] sm:$0xf]
        %v2387 = vld [vmem:[%s2383 + $0xc] sm:$0xf]
        %v2388 = vld [vmem:[%s2383 + $0x10] sm:$0xf]
        %v2389 = vld [vmem:[%s2383 + $0x14] sm:$0xf]
        %v2390 = vld [vmem:[%s2383 + $0x18] sm:$0xf]
        %v2391 = vld [vmem:[%s2383 + $0x1c] sm:$0xf]
        %v2392 = vld [vmem:[%s2383 + $0x20] sm:$0xf]
        %v2393 = vld [vmem:[%s2383 + $0x24] sm:$0xf]
        %v2394 = vrot.slane %v2047, 2
        %v2405 = vunpack.c.l.b16 %v2384
        %v2406 = vunpack.c.l.b16 %v2385
        %v2407 = vunpack.c.l.b16 %v2386
        %v2408 = vunpack.c.l.b16 %v2387
        %v2409 = vunpack.c.l.b16 %v2388
        %v2410 = vunpack.c.l.b16 %v2389
        %v2411 = vunpack.c.l.b16 %v2390
        %v2412 = vunpack.c.l.b16 %v2391
        %v2413 = vunpack.c.l.b16 %v2392
        %v2414 = vunpack.c.l.b16 %v2393
        %v2415 = vpack.c.b16 %v2406, %v2405
        %v2416 = vpack.c.b16 %v2408, %v2407
        %v2417 = vpack.c.b16 %v2410, %v2409
        %v2418 = vpack.c.b16 %v2412, %v2411
        %v2419 = vpack.c.b16 %v2414, %v2413
        %v2426 = vsel %vm2078, %v2394, 0
        %2428 = vmatprep.subr.bf16.mxu0 0
        %2429 = vmatpush1.bf16.msra.mxu0 0
        %2430 = vmatprep.subr.bf16.mxu0 0
        %2431 = vmatpush1.bf16.msra.mxu0 0
        %2432 = vmatprep.subr.bf16.mxu0 0
        %2433 = vmatpush1.bf16.msra.mxu0 0
        %2434 = vmatprep.subr.bf16.mxu0 0
        %2435 = vmatpush1.bf16.msra.mxu0 %v2419
        %2436 = vmatprep.subr.bf16.mxu0 0
        %2437 = vmatpush1.bf16.msra.mxu0 %v2418
        %2438 = vmatprep.subr.bf16.mxu0 0
        %2439 = vmatpush1.bf16.msra.mxu0 %v2417
        %2440 = vmatprep.subr.bf16.mxu0 0
        %2441 = vmatpush1.bf16.msra.mxu0 %v2416
        %2442 = vmatprep.subr.bf16.mxu0 0
        %2443 = vmatpush1.bf16.msra.mxu0 %v2415
        %2444 = vmatprep.subr.bf16.mxu0 0
        %2445 = vmatpush2.bf16.msra.mxu0 0
        %2446 = vmatprep.subr.bf16.mxu0 0
        %2447 = vmatpush2.bf16.msra.mxu0 0
        %2448 = vmatprep.subr.bf16.mxu0 0
        %2449 = vmatpush2.bf16.msra.mxu0 0
        %2450 = vmatprep.subr.bf16.mxu0 0
        %2451 = vmatpush2.bf16.msra.mxu0 0
        %2452 = vmatprep.subr.bf16.mxu0 0
        %2453 = vmatpush2.bf16.msra.mxu0 0
        %2454 = vmatprep.subr.bf16.mxu0 0
        %2455 = vmatpush2.bf16.msra.mxu0 0
        %2456 = vmatprep.subr.bf16.mxu0 0
        %2457 = vmatpush2.bf16.msra.mxu0 0
        %2458 = vmatprep.subr.bf16.mxu0 0
        %2459 = vmatpush2.bf16.msra.mxu0 0
        %2460 = vmatprep.mubr.bf16.mxu0 0
        %2461 = vmatmul.mubr.bf16.gmra.mxu0 %v2426
        %v2462 = vpop.f32.mrf.mxu0
        %v2463 = vadd.f32 0.0, %v2462
        %v2464 = vpop.f32.mrf.mxu0
        %v2465 = vpop.f32.mrf.mxu0
        %v2466 = vpop.f32.mrf.mxu0
        %2467 = vdwg.mxu0
        %v2468 = vadd.f32 %v2382, %v2463
        %v2469 = vmax.f32 %v2468, 0.0
        %v2470 = vld [vmem:[%s11] sm:$0xf]
        %v2471 = vld [vmem:[%s11 + $0x4] sm:$0xf]
        %v2472 = vld [vmem:[%s11 + $0x8] sm:$0xf]
        %v2473 = vld [vmem:[%s11 + $0xc] sm:$0xf]
        %v2474 = vld [vmem:[%s11 + $0x10] sm:$0xf]
        %v2475 = vld [vmem:[%s11 + $0x14] sm:$0xf]
        %v2476 = vld [vmem:[%s11 + $0x18] sm:$0xf]
        %v2477 = vld [vmem:[%s11 + $0x1c] sm:$0xf]
        %v2478 = vld [vmem:[%s11 + $0x20] sm:$0xf]
        %v2479 = vld [vmem:[%s11 + $0x24] sm:$0xf]
        %v2480 = vld [vmem:[%s11 + $0x28] sm:$0xf]
        %v2481 = vld [vmem:[%s11 + $0x2c] sm:$0xf]
        %v2482 = vld [vmem:[%s11 + $0x30] sm:$0xf]
        %v2483 = vld [vmem:[%s11 + $0x34] sm:$0xf]
        %v2484 = vld [vmem:[%s11 + $0x38] sm:$0xf]
        %v2485 = vpack.c.bf16 %v2469, %v2469
        %v2486 = vld [vmem:[%s12] sm:$0x1]
        %v2502 = vunpack.c.l.b16 %v2470
        %v2503 = vunpack.c.l.b16 %v2471
        %v2504 = vunpack.c.l.b16 %v2472
        %v2505 = vunpack.c.l.b16 %v2473
        %v2506 = vunpack.c.l.b16 %v2474
        %v2507 = vunpack.c.l.b16 %v2475
        %v2508 = vunpack.c.l.b16 %v2476
        %v2509 = vunpack.c.l.b16 %v2477
        %v2510 = vunpack.c.l.b16 %v2478
        %v2511 = vunpack.c.l.b16 %v2479
        %v2512 = vunpack.c.l.b16 %v2480
        %v2513 = vunpack.c.l.b16 %v2481
        %v2514 = vunpack.c.l.b16 %v2482
        %v2515 = vunpack.c.l.b16 %v2483
        %v2516 = vunpack.c.l.b16 %v2484
        %v2517 = vpack.c.b16 %v2503, %v2502
        %v2518 = vpack.c.b16 %v2505, %v2504
        %v2519 = vpack.c.b16 %v2507, %v2506
        %v2520 = vpack.c.b16 %v2509, %v2508
        %v2521 = vpack.c.b16 %v2511, %v2510
        %v2522 = vpack.c.b16 %v2513, %v2512
        %v2523 = vpack.c.b16 %v2515, %v2514
        %v2524 = vpack.c.b16 %v2516, %v2516
        %vm2532 = vcmask 982016
        %v2534 = vsel %vm2532, %v2485, 0
        %v2537 = vsel %vm1166, %v2524, 0
        %2539 = vmatprep.subr.bf16.mxu0 0
        %2540 = vmatpush1.bf16.msra.mxu0 %v2537
        %2541 = vmatprep.subr.bf16.mxu0 0
        %2542 = vmatpush1.bf16.msra.mxu0 %v2523
        %2543 = vmatprep.subr.bf16.mxu0 0
        %2544 = vmatpush1.bf16.msra.mxu0 %v2522
        %2545 = vmatprep.subr.bf16.mxu0 0
        %2546 = vmatpush1.bf16.msra.mxu0 %v2521
        %2547 = vmatprep.subr.bf16.mxu0 0
        %2548 = vmatpush1.bf16.msra.mxu0 %v2520
        %2549 = vmatprep.subr.bf16.mxu0 0
        %2550 = vmatpush1.bf16.msra.mxu0 %v2519
        %2551 = vmatprep.subr.bf16.mxu0 0
        %2552 = vmatpush1.bf16.msra.mxu0 %v2518
        %2553 = vmatprep.subr.bf16.mxu0 0
        %2554 = vmatpush1.bf16.msra.mxu0 %v2517
        %2555 = vmatprep.subr.bf16.mxu0 0
        %2556 = vmatpush2.bf16.msra.mxu0 0
        %2557 = vmatprep.subr.bf16.mxu0 0
        %2558 = vmatpush2.bf16.msra.mxu0 0
        %2559 = vmatprep.subr.bf16.mxu0 0
        %2560 = vmatpush2.bf16.msra.mxu0 0
        %2561 = vmatprep.subr.bf16.mxu0 0
        %2562 = vmatpush2.bf16.msra.mxu0 0
        %2563 = vmatprep.subr.bf16.mxu0 0
        %2564 = vmatpush2.bf16.msra.mxu0 0
        %2565 = vmatprep.subr.bf16.mxu0 0
        %2566 = vmatpush2.bf16.msra.mxu0 0
        %2567 = vmatprep.subr.bf16.mxu0 0
        %2568 = vmatpush2.bf16.msra.mxu0 0
        %2569 = vmatprep.subr.bf16.mxu0 0
        %2570 = vmatpush2.bf16.msra.mxu0 0
        %2571 = vmatprep.mubr.bf16.mxu0 0
        %2572 = vmatmul.mubr.bf16.gmra.mxu0 %v2534
        %v2573 = vpop.f32.mrf.mxu0
        %v2574 = vadd.f32 %v2486, %v2573
        %v2575 = vpop.f32.mrf.mxu0
        %v2576 = vpop.f32.mrf.mxu0
        %v2577 = vpop.f32.mrf.mxu0
        %2578 = vdwg.mxu0
        %v2579 = vmax.f32 %v2574, 0.0
        %v2580 = vld [vmem:[%s13] sm:$0xf]
        %v2581 = vld [vmem:[%s13 + $0x4] sm:$0xf]
        %v2582 = vld [vmem:[%s13 + $0x8] sm:$0xf]
        %v2583 = vld [vmem:[%s13 + $0xc] sm:$0xf]
        %v2584 = vld [vmem:[%s13 + $0x10] sm:$0xf]
        %v2585 = vld [vmem:[%s13 + $0x14] sm:$0xf]
        %v2586 = vld [vmem:[%s13 + $0x18] sm:$0xf]
        %v2587 = vld [vmem:[%s13 + $0x1c] sm:$0xf]
        %v2588 = vld [vmem:[%s13 + $0x20] sm:$0xf]
        %v2589 = vld [vmem:[%s13 + $0x24] sm:$0xf]
        %v2590 = vld [vmem:[%s13 + $0x28] sm:$0x3]
        %v2591 = vpack.c.bf16 %v2579, %v2579
        %v2592 = vld [vmem:[%s14] sm:$0x1]
        %v2604 = vunpack.c.l.b16 %v2580
        %v2605 = vunpack.c.l.b16 %v2581
        %v2606 = vunpack.c.l.b16 %v2582
        %v2607 = vunpack.c.l.b16 %v2583
        %v2608 = vunpack.c.l.b16 %v2584
        %v2609 = vunpack.c.l.b16 %v2585
        %v2610 = vunpack.c.l.b16 %v2586
        %v2611 = vunpack.c.l.b16 %v2587
        %v2612 = vunpack.c.l.b16 %v2588
        %v2613 = vunpack.c.l.b16 %v2589
        %v2614 = vunpack.c.l.b16 %v2590
        %v2615 = vpack.c.b16 %v2605, %v2604
        %v2616 = vpack.c.b16 %v2607, %v2606
        %v2617 = vpack.c.b16 %v2609, %v2608
        %v2618 = vpack.c.b16 %v2611, %v2610
        %v2619 = vpack.c.b16 %v2613, %v2612
        %v2620 = vpack.c.b16 %v2614, %v2614
        %v2627 = vsel %vm1279, %v2591, 0
        %v2630 = vsel %vm1283, %v2620, 0
        %2632 = vmatprep.subr.bf16.mxu0 0
        %2633 = vmatpush1.bf16.msra.mxu0 0
        %2634 = vmatprep.subr.bf16.mxu0 0
        %2635 = vmatpush1.bf16.msra.mxu0 0
        %2636 = vmatprep.subr.bf16.mxu0 0
        %2637 = vmatpush1.bf16.msra.mxu0 %v2630
        %2638 = vmatprep.subr.bf16.mxu0 0
        %2639 = vmatpush1.bf16.msra.mxu0 %v2619
        %2640 = vmatprep.subr.bf16.mxu0 0
        %2641 = vmatpush1.bf16.msra.mxu0 %v2618
        %2642 = vmatprep.subr.bf16.mxu0 0
        %2643 = vmatpush1.bf16.msra.mxu0 %v2617
        %2644 = vmatprep.subr.bf16.mxu0 0
        %2645 = vmatpush1.bf16.msra.mxu0 %v2616
        %2646 = vmatprep.subr.bf16.mxu0 0
        %2647 = vmatpush1.bf16.msra.mxu0 %v2615
        %2648 = vmatprep.subr.bf16.mxu0 0
        %2649 = vmatpush2.bf16.msra.mxu0 0
        %2650 = vmatprep.subr.bf16.mxu0 0
        %2651 = vmatpush2.bf16.msra.mxu0 0
        %2652 = vmatprep.subr.bf16.mxu0 0
        %2653 = vmatpush2.bf16.msra.mxu0 0
        %2654 = vmatprep.subr.bf16.mxu0 0
        %2655 = vmatpush2.bf16.msra.mxu0 0
        %2656 = vmatprep.subr.bf16.mxu0 0
        %2657 = vmatpush2.bf16.msra.mxu0 0
        %2658 = vmatprep.subr.bf16.mxu0 0
        %2659 = vmatpush2.bf16.msra.mxu0 0
        %2660 = vmatprep.subr.bf16.mxu0 0
        %2661 = vmatpush2.bf16.msra.mxu0 0
        %2662 = vmatprep.subr.bf16.mxu0 0
        %2663 = vmatpush2.bf16.msra.mxu0 0
        %2664 = vmatprep.mubr.bf16.mxu0 0
        %2665 = vmatmul.mubr.bf16.gmra.mxu0 %v2627
        %v2666 = vpop.f32.mrf.mxu0
        %v2667 = vadd.f32 %v2592, %v2666
        %v2668 = vpop.f32.mrf.mxu0
        %v2669 = vpop.f32.mrf.mxu0
        %v2670 = vpop.f32.mrf.mxu0
        %2671 = vdwg.mxu0
        %vm2672 = vcmask 73728
        %2673 = vst.msk [vmem:[%s486] sm:$0x1] %vm2672, %v2667
        %s2674 = sand.u32 %s357, 1
        %s2675 = scalar_lea.sflag [#allocation3], %s2674
        %s2676 = sand.u32 %s357, 1
        %s2677 = scalar_lea.vmem [#allocation2], %s2676
        // Predicated region
        $region81: #{lenet_forward.1} parent=79 // pred_check
          %p2678 = pneg %p367
        $region82: #{lenet_forward.1} parent=79 // pred_check_branch
          %2680 = sbr.rel (%p2678) target = $region84
        $region83: #{lenet_forward.1} parent=79 // pred_region
          %s2682 = ssub.s32 16, 16
          %2683 = vsyncadd %s2675, %s2682
          %s2684 = smul.addr %s29, 16
          %s2685 = scalar_lea.hbm %s15, %s2684
          %s2687 = sshll.u32 %s2677, 4
          %s2688 = int_to_ptr.vmem [resolvable:$true] %s2687
          %2690 = dma.vmem_to_hbm [thread:$0]  %s2688, 16, %s2685, %s2675
        $region84: #{lenet_forward.1} parent=79 // pred_fallthru
          _
      $region80: #{lenet_forward.1} parent=5 // pred_fallthru
        _
      %p2691 = scmp.le.s32.totalorder 2, %s24
      // Predicated region
      $region85: #{lenet_forward.1} parent=5 // pred_check
        %p2692 = pneg %p2691
      $region86: #{lenet_forward.1} parent=5 // pred_check_branch
        %2694 = sbr.rel (%p2692) target = $region88
      $region87: #{lenet_forward.1} parent=5 // pred_region
        %s2695 = ssub.s32 %s24, 2
        // Predicated region
        $region89: #{lenet_forward.1} parent=87 // pred_check
          %p2696 = pneg %p373
        $region90: #{lenet_forward.1} parent=87 // pred_check_branch
          %2698 = sbr.rel (%p2696) target = $region92
        $region91: #{lenet_forward.1} parent=87 // pred_region
          %s2699 = sand.u32 %s358, 1
          %s2700 = scalar_lea.sflag [#allocation3], %s2699
          %s2701 = sand.u32 %s358, 1
          %s2702 = scalar_lea.vmem [#allocation2], %s2701
          %2703 = dma.done %s2700, 16
        $region92: #{lenet_forward.1} parent=87 // pred_fallthru
          _
      $region88: #{lenet_forward.1} parent=5 // pred_fallthru
        _
    $region6: #{lenet_forward.1} parent=1 // loop_footer
      %s28 = sadd.s32 1, %s24
    $region7: #{lenet_forward.1} parent=1 // loop_footer_branch
      %23 = sbr.rel target = $region3
    $region8: #{lenet_forward.1} parent=1 // loop_exit
      _
    %2704 = vsyncpa [#allocation3], 1
    %s2705 = scalar_lea.sflag [#allocation3], 1
    %2706 = vsyncpa %s2705, 1

</llo_original>
